<compile_context>
chip_gen: v6e
topology: v6e:2x2x1
jax: 0.10.0
libtpu: 0.0.40
codegen_flags: <defaults>
</compile_context>

<pallas_src>
import math
import functools

import jax
import jax.numpy as jnp
from jax.experimental import pallas as pl
from jax.experimental.pallas import tpu as pltpu

EPS = 1e-5


def _layernorm(x, gamma, beta):
    mu = jnp.mean(x, axis=-1, keepdims=True)
    var = jnp.mean((x - mu) ** 2, axis=-1, keepdims=True)
    return (x - mu) * jax.lax.rsqrt(var + EPS) * gamma + beta


def encoder_layer_kernel(
    x_ref,               # (R, E) f32, R = block_batch * S rows
    g1_ref, b1_ref,      # (1, E) layernorm1
    wqkv_ref, bqkv_ref,  # (E, 3E) bf16, (1, 3E) f32
    wo_ref, bo_ref,      # (E, E)  bf16, (1, E)  f32
    g2_ref, b2_ref,      # (1, E) layernorm2
    w1_ref, fb1_ref,     # (E, F) bf16, (1, F) f32
    w2_ref, fb2_ref,     # (F, E) bf16, (1, E) f32
    o_ref,               # (R, E) f32
    *, num_heads: int, seq_len: int,
):
    x = x_ref[...]                       # (R, E) f32
    R, E = x.shape
    S = seq_len
    Bt = R // S                          # batch elements in this row slab
    H = num_heads
    D = E // H
    scale = 1.0 / math.sqrt(D)
    bf16 = jnp.bfloat16

    # ---- LayerNorm 1 (f32) ----
    xn = _layernorm(x, g1_ref[0], b1_ref[0])

    # ---- QKV projection: single big-M MXU matmul, bf16 operands, f32 accum ----
    # Cast the (R, 3E) result to bf16 ONCE right after the bias add.
    qkv = (jnp.dot(xn.astype(bf16), wqkv_ref[...],
                   preferred_element_type=jnp.float32) + bqkv_ref[0]).astype(bf16)

    # ---- Multi-head self-attention ----
    # Fold (head, batch) into one leading batch dim so QK^T and PV are each a single
    # batched MXU contraction.  Only leading-dim reshapes/concats are used (layout
    # preserving); the per-head D-wide lane slices below are the single remaining
    # relayout the fused layout forces.
    def split_heads(cols):  # (R, D*H column block) -> (H*Bt, S, D), head-major batch
        return jnp.concatenate(
            [cols[:, h * D:(h + 1) * D].reshape(Bt, S, D) for h in range(H)], axis=0)

    qh = split_heads(qkv[:, :E])
    kh = split_heads(qkv[:, E:2 * E])
    vh = split_heads(qkv[:, 2 * E:])

    # TODO(synk): for production sequence lengths (esp. v7x / 64 MiB VMEM), tile K/V
    # along S with online softmax instead of materializing the (H*Bt, S, S) score block.
    s = jnp.einsum("bqd,bkd->bqk", qh, kh,
                   preferred_element_type=jnp.float32) * scale     # (H*Bt, S, S) f32
    s = s - jnp.max(s, axis=-1, keepdims=True)
    p = jnp.exp(s)
    # TODO(synk): on v6e/v7x the exp could run in bf16 (2x EUP rate); kept f32 for v5e.
    p = p * pl.reciprocal(jnp.sum(p, axis=-1, keepdims=True), approx=True)

    ov = jnp.einsum("bqk,bkd->bqd", p.astype(bf16), vh,
                    preferred_element_type=jnp.float32)            # (H*Bt, S, D) f32
    ov = ov.astype(bf16)

    # Merge heads back into one lane-dense (R, E) value (no scratch, no masked stores);
    # it feeds the output projection directly.
    attn = jnp.concatenate(
        [ov[h * Bt:(h + 1) * Bt].reshape(R, D) for h in range(H)], axis=-1)  # (R, E) bf16

    # ---- Output projection (big-M matmul) ----
    attn = jnp.dot(attn, wo_ref[...],
                   preferred_element_type=jnp.float32) + bo_ref[0]

    # residual (dropout = identity in eval mode)
    x = x + attn

    # ---- LayerNorm 2 + FFN ----
    xn2 = _layernorm(x, g2_ref[0], b2_ref[0])
    h1 = (jnp.dot(xn2.astype(bf16), w1_ref[...],
                  preferred_element_type=jnp.float32) + fb1_ref[0]).astype(bf16)
    h1 = jnp.maximum(h1, 0)                                        # ReLU (bf16)
    ffn = jnp.dot(h1, w2_ref[...],
                  preferred_element_type=jnp.float32) + fb2_ref[0]

    o_ref[...] = x + ffn
    # TODO(synk): dropout (p=0.1) omitted -- forward reproduced in eval/inference mode.


def _pick_block_batch(batch, seq, target_rows=1024):
    """Pick block_batch: largest divisor of `batch` whose row slab (d*seq) fits
    target_rows, keeping the slab sublane-aligned and — when batch >= 2 — keeping
    at least 2 grid steps so the "parallel" axis can shard across v7x's 2 TCs."""
    divisors = [d for d in range(1, batch + 1) if batch % d == 0]
    aligned = [d for d in divisors if (d * seq) % 8 == 0 or d == batch]
    if not aligned:
        aligned = [batch]
    multi = [d for d in aligned if batch // d >= 2]
    pool = multi if multi else aligned
    fit = [d for d in pool if d * seq <= max(seq, target_rows)]
    return max(fit) if fit else min(pool)


def _vmem_limit_bytes(R, E, F, Bt, S, H):
    """Actual VMEM budget: tiles (double-buffered) + single-buffered bf16 weights +
    in-kernel temporaries, with headroom, capped below physical VMEM per core."""
    f32, bf = 4, 2
    io = 2 * (R * E * f32) * 2                       # x in + out tiles, double-buffered
    weights = (4 * E * E + 2 * E * F) * bf           # qkv(3E*E) + wo(E*E) + w1 + w2
    biases = (3 * E + 2 * E + F + 4 * E) * f32
    temps = (R * 3 * E * bf                          # qkv bf16
             + 3 * R * E * bf                        # head-major q/k/v copies
             + H * Bt * S * S * (f32 + bf)           # scores f32 + probs bf16
             + 2 * R * E * f32                       # attn out + residual f32
             + R * F * bf)                           # ffn hidden bf16
    budget = max(int((io + weights + biases + temps) * 1.5) + (2 << 20), 32 << 20)
    try:
        cap = int(pltpu.get_tpu_info().vmem_capacity_bytes)
    except Exception:
        cap = 64 << 20                               # v7x per-core physical (smallest)
    return min(budget, (cap * 7) // 8)


def _const_spec(shape):
    """Constant-index (weight/bias) input: single-buffered — the block never changes
    across grid steps, so double-buffering it only wastes VMEM."""
    nd = len(shape)
    idx = lambda i, _nd=nd: (0,) * _nd
    try:
        return pl.BlockSpec(shape, idx, pipeline_mode=pl.Buffered(1))
    except (TypeError, AttributeError):   # older jax without pipeline_mode/Buffered
        return pl.BlockSpec(shape, idx)


def prepare_params(params):
    """One-time f32->bf16 conversion of the matmul weights (hoisted out of the
    per-call path; call once and cache)."""
    p = dict(params)
    for k in ("wqkv", "wo", "w1", "w2"):
        p[k] = params[k].astype(jnp.bfloat16)
    return p


def transformer_encoder_layer(x, params, num_heads, *, block_batch=None,
                              target_rows=1024):
    B, S, E = x.shape
    F = params["w1"].shape[1]
    H = num_heads

    if block_batch is None:
        block_batch = _pick_block_batch(B, S, target_rows)
    assert B % block_batch == 0
    R = block_batch * S
    grid = (B // block_batch,)

    # Fold batch into rows so every projection/FFN matmul sees M = block_batch * S.
    x2 = x.reshape(B * S, E)

    def as_bf16(w):  # no-op if prepare_params() already converted
        return w if w.dtype == jnp.bfloat16 else w.astype(jnp.bfloat16)

    wqkv, wo, w1, w2 = (as_bf16(params[k]) for k in ("wqkv", "wo", "w1", "w2"))

    in_specs = [
        pl.BlockSpec((R, E), lambda i: (i, 0)),              # x rows (double-buffered)
        _const_spec((1, E)), _const_spec((1, E)),            # ln1 gamma/beta
        _const_spec((E, 3 * E)), _const_spec((1, 3 * E)),    # qkv proj
        _const_spec((E, E)), _const_spec((1, E)),            # out proj
        _const_spec((1, E)), _const_spec((1, E)),            # ln2 gamma/beta
        _const_spec((E, F)), _const_spec((1, F)),            # ffn linear1
        _const_spec((F, E)), _const_spec((1, E)),            # ffn linear2
    ]
    out_spec = pl.BlockSpec((R, E), lambda i: (i, 0))

    kernel = functools.partial(encoder_layer_kernel, num_heads=H, seq_len=S)

    cost = pl.CostEstimate(
        flops=int(B * S * (8 * E * E + 4 * S * E + 4 * E * F)),
        transcendentals=int(B * H * S * S + 4 * B * S),
        bytes_accessed=int(2 * B * S * E * 4
                           + (4 * E * E + 2 * E * F) * 2
                           + (8 * E + F) * 4),
    )

    out2 = pl.pallas_call(
        kernel,
        out_shape=jax.ShapeDtypeStruct((B * S, E), jnp.float32),
        grid_spec=pltpu.PrefetchScalarGridSpec(
            num_scalar_prefetch=0,
            grid=grid,
            in_specs=in_specs,
            out_specs=out_spec,
        ),
        compiler_params=pltpu.CompilerParams(
            dimension_semantics=("parallel",),
            vmem_limit_bytes=_vmem_limit_bytes(R, E, F, block_batch, S, H),
        ),
        cost_estimate=cost,
    )(
        x2,
        params["g1"], params["b1"],
        wqkv, params["bqkv"],
        wo, params["bo"],
        params["g2"], params["b2"],
        w1, params["fb1"],
        w2, params["fb2"],
    )
    return out2.reshape(B, S, E)


def reference(x, params, num_heads):
    """Pure-JAX f32 reference mirroring the PyTorch forward (eval mode)."""
    B, S, E = x.shape
    D = E // num_heads

    def ln(v, g, b):
        mu = jnp.mean(v, axis=-1, keepdims=True)
        var = jnp.mean((v - mu) ** 2, axis=-1, keepdims=True)
        return (v - mu) / jnp.sqrt(var + EPS) * g + b

    xn = ln(x, params["g1"][0], params["b1"][0])
    qkv = xn @ params["wqkv"] + params["bqkv"][0]
    q, k, v = jnp.split(qkv, 3, axis=-1)
    q = q.reshape(B, S, num_heads, D).transpose(0, 2, 1, 3) / math.sqrt(D)
    k = k.reshape(B, S, num_heads, D).transpose(0, 2, 1, 3)
    v = v.reshape(B, S, num_heads, D).transpose(0, 2, 1, 3)
    s = jnp.einsum("bhqd,bhkd->bhqk", q, k)
    p = jax.nn.softmax(s, axis=-1)
    a = jnp.einsum("bhqk,bhkd->bhqd", p, v).transpose(0, 2, 1, 3).reshape(B, S, E)
    a = a @ params["wo"] + params["bo"][0]
    x = x + a
    xn2 = ln(x, params["g2"][0], params["b2"][0])
    h = jnp.maximum(xn2 @ params["w1"] + params["fb1"][0], 0.0)
    f = h @ params["w2"] + params["fb2"][0]
    return x + f


if __name__ == "__main__":
    B, S, E, H, F = 2, 8, 32, 4, 64

    key = jax.random.PRNGKey(0)
    keys = jax.random.split(key, 8)

    x = jax.random.normal(keys[0], (B, S, E), dtype=jnp.float32)

    def init(k, shape, scale=0.1):
        return (scale * jax.random.normal(k, shape)).astype(jnp.float32)

    params = {
        "g1": jnp.ones((1, E), jnp.float32),
        "b1": jnp.zeros((1, E), jnp.float32),
        "wqkv": init(keys[1], (E, 3 * E)),      # torch in_proj_weight.T
        "bqkv": init(keys[2], (1, 3 * E)),
        "wo": init(keys[3], (E, E)),            # torch out_proj.weight.T
        "bo": init(keys[4], (1, E)),
        "g2": jnp.ones((1, E), jnp.float32),
        "b2": jnp.zeros((1, E), jnp.float32),
        "w1": init(keys[5], (E, F)),            # ffn linear1 weight.T
        "fb1": init(keys[6], (1, F)),
        "w2": init(keys[7], (F, E)),            # ffn linear2 weight.T
        "fb2": jnp.zeros((1, E), jnp.float32),
    }

    # One-time bf16 weight conversion, hoisted out of the per-call path.
    kernel_params = prepare_params(params)

    out = transformer_encoder_layer(x, kernel_params, num_heads=H)
    out = jax.block_until_ready(out)

    ref = reference(x, params, num_heads=H)
    assert out.shape == (B, S, E)
    # bf16 MXU operands + approx reciprocal -> small numeric drift vs f32 reference.
    assert jnp.allclose(out, ref, atol=3e-2, rtol=3e-2), "mismatch vs reference"

    print("KERNEL_OK")
</pallas_src>

<mosaic_0001>
module attributes {stable_mosaic.version = 11 : i64} {
  func.func @encoder_layer_kernel(%arg0: i32, %arg1: memref<8x32xf32, #tpu.memory_space<vmem>>, %arg2: memref<1x32xf32, #tpu.memory_space<vmem>>, %arg3: memref<1x32xf32, #tpu.memory_space<vmem>>, %arg4: memref<32x96xbf16, #tpu.memory_space<vmem>>, %arg5: memref<1x96xf32, #tpu.memory_space<vmem>>, %arg6: memref<32x32xbf16, #tpu.memory_space<vmem>>, %arg7: memref<1x32xf32, #tpu.memory_space<vmem>>, %arg8: memref<1x32xf32, #tpu.memory_space<vmem>>, %arg9: memref<1x32xf32, #tpu.memory_space<vmem>>, %arg10: memref<32x64xbf16, #tpu.memory_space<vmem>>, %arg11: memref<1x64xf32, #tpu.memory_space<vmem>>, %arg12: memref<64x32xbf16, #tpu.memory_space<vmem>>, %arg13: memref<1x32xf32, #tpu.memory_space<vmem>>, %arg14: memref<8x32xf32, #tpu.memory_space<vmem>>) attributes {dimension_semantics = [#tpu.dimension_semantics<parallel>], iteration_bounds = array<i64: 2>, scalar_prefetch = 0 : i64, scratch_operands = 0 : i64, tpu.core_type = #tpu.core_type<tc>, window_params = [{transform_indices = @transform_0, window_bounds = array<i64: 8, 32>}, {pipeline_mode = #tpu.pipeline_mode<synchronous>, transform_indices = @transform_1, window_bounds = array<i64: 1, 32>}, {pipeline_mode = #tpu.pipeline_mode<synchronous>, transform_indices = @transform_2, window_bounds = array<i64: 1, 32>}, {pipeline_mode = #tpu.pipeline_mode<synchronous>, transform_indices = @transform_3, window_bounds = array<i64: 32, 96>}, {pipeline_mode = #tpu.pipeline_mode<synchronous>, transform_indices = @transform_4, window_bounds = array<i64: 1, 96>}, {pipeline_mode = #tpu.pipeline_mode<synchronous>, transform_indices = @transform_5, window_bounds = array<i64: 32, 32>}, {pipeline_mode = #tpu.pipeline_mode<synchronous>, transform_indices = @transform_6, window_bounds = array<i64: 1, 32>}, {pipeline_mode = #tpu.pipeline_mode<synchronous>, transform_indices = @transform_7, window_bounds = array<i64: 1, 32>}, {pipeline_mode = #tpu.pipeline_mode<synchronous>, transform_indices = @transform_8, window_bounds = array<i64: 1, 32>}, {pipeline_mode = #tpu.pipeline_mode<synchronous>, transform_indices = @transform_9, window_bounds = array<i64: 32, 64>}, {pipeline_mode = #tpu.pipeline_mode<synchronous>, transform_indices = @transform_10, window_bounds = array<i64: 1, 64>}, {pipeline_mode = #tpu.pipeline_mode<synchronous>, transform_indices = @transform_11, window_bounds = array<i64: 64, 32>}, {pipeline_mode = #tpu.pipeline_mode<synchronous>, transform_indices = @transform_12, window_bounds = array<i64: 1, 32>}, {transform_indices = @transform_13, window_bounds = array<i64: 8, 32>}]} {
    %c0 = arith.constant 0 : index
    %c0_0 = arith.constant 0 : index
    %0 = vector.load %arg1[%c0, %c0_0] : memref<8x32xf32, #tpu.memory_space<vmem>>, vector<8x32xf32>
    %c0_1 = arith.constant 0 : index
    %c0_2 = arith.constant 0 : index
    %1 = vector.load %arg2[%c0_1, %c0_2] : memref<1x32xf32, #tpu.memory_space<vmem>>, vector<1x32xf32>
    %2 = vector.shape_cast %1 : vector<1x32xf32> to vector<32xf32>
    %c0_3 = arith.constant 0 : index
    %c0_4 = arith.constant 0 : index
    %3 = vector.load %arg3[%c0_3, %c0_4] : memref<1x32xf32, #tpu.memory_space<vmem>>, vector<1x32xf32>
    %4 = vector.shape_cast %3 : vector<1x32xf32> to vector<32xf32>
    %cst = arith.constant dense<0.000000e+00> : vector<8xf32>
    %5 = vector.multi_reduction <add>, %0, %cst [1] : vector<8x32xf32> to vector<8xf32>
    %6 = vector.shape_cast %5 : vector<8xf32> to vector<8x1xf32>
    %cst_5 = arith.constant 3.200000e+01 : f32
    %7 = vector.broadcast %cst_5 : f32 to vector<8x1xf32>
    %8 = arith.divf %6, %7 : vector<8x1xf32>
    %9 = vector.broadcast %8 : vector<8x1xf32> to vector<8x32xf32>
    %10 = arith.subf %0, %9 : vector<8x32xf32>
    %11 = arith.mulf %10, %10 : vector<8x32xf32>
    %cst_6 = arith.constant dense<0.000000e+00> : vector<8xf32>
    %12 = vector.multi_reduction <add>, %11, %cst_6 [1] : vector<8x32xf32> to vector<8xf32>
    %13 = vector.shape_cast %12 : vector<8xf32> to vector<8x1xf32>
    %cst_7 = arith.constant 3.200000e+01 : f32
    %14 = vector.broadcast %cst_7 : f32 to vector<8x1xf32>
    %15 = arith.divf %13, %14 : vector<8x1xf32>
    %16 = vector.broadcast %8 : vector<8x1xf32> to vector<8x32xf32>
    %17 = arith.subf %0, %16 : vector<8x32xf32>
    %cst_8 = arith.constant 9.99999974E-6 : f32
    %18 = vector.broadcast %cst_8 : f32 to vector<8x1xf32>
    %19 = arith.addf %15, %18 : vector<8x1xf32>
    %20 = math.rsqrt %19 : vector<8x1xf32>
    %21 = vector.broadcast %20 : vector<8x1xf32> to vector<8x32xf32>
    %22 = arith.mulf %17, %21 : vector<8x32xf32>
    %23 = vector.shape_cast %2 : vector<32xf32> to vector<1x32xf32>
    %24 = vector.broadcast %23 : vector<1x32xf32> to vector<8x32xf32>
    %25 = arith.mulf %22, %24 : vector<8x32xf32>
    %26 = vector.shape_cast %4 : vector<32xf32> to vector<1x32xf32>
    %27 = vector.broadcast %26 : vector<1x32xf32> to vector<8x32xf32>
    %28 = arith.addf %25, %27 : vector<8x32xf32>
    %29 = arith.truncf %28 : vector<8x32xf32> to vector<8x32xbf16>
    %c0_9 = arith.constant 0 : index
    %c0_10 = arith.constant 0 : index
    %30 = vector.load %arg4[%c0_9, %c0_10] : memref<32x96xbf16, #tpu.memory_space<vmem>>, vector<32x96xbf16>
    %cst_11 = arith.constant dense<0.000000e+00> : vector<8x96xf32>
    %31 = tpu.matmul %29, %30, %cst_11 {dimension_numbers = #tpu.dot_dimension_numbers<[1], [0], [0], [1], [0, 0, 1, 1], [], []>} : vector<8x32xbf16>, vector<32x96xbf16>, vector<8x96xf32> -> vector<8x96xf32>
    %c0_12 = arith.constant 0 : index
    %c0_13 = arith.constant 0 : index
    %32 = vector.load %arg5[%c0_12, %c0_13] : memref<1x96xf32, #tpu.memory_space<vmem>>, vector<1x96xf32>
    %33 = vector.shape_cast %32 : vector<1x96xf32> to vector<96xf32>
    %34 = vector.shape_cast %33 : vector<96xf32> to vector<1x96xf32>
    %35 = vector.broadcast %34 : vector<1x96xf32> to vector<8x96xf32>
    %36 = arith.addf %31, %35 : vector<8x96xf32>
    %37 = arith.truncf %36 : vector<8x96xf32> to vector<8x96xbf16>
    %38 = vector.extract_strided_slice %37 {offsets = [0, 0], sizes = [8, 32], strides = [1, 1]} : vector<8x96xbf16> to vector<8x32xbf16>
    %39 = vector.extract_strided_slice %38 {offsets = [0, 0], sizes = [8, 8], strides = [1, 1]} : vector<8x32xbf16> to vector<8x8xbf16>
    %40 = vector.shape_cast %39 : vector<8x8xbf16> to vector<1x8x8xbf16>
    %41 = vector.extract_strided_slice %38 {offsets = [0, 8], sizes = [8, 8], strides = [1, 1]} : vector<8x32xbf16> to vector<8x8xbf16>
    %42 = vector.shape_cast %41 : vector<8x8xbf16> to vector<1x8x8xbf16>
    %43 = vector.extract_strided_slice %38 {offsets = [0, 16], sizes = [8, 8], strides = [1, 1]} : vector<8x32xbf16> to vector<8x8xbf16>
    %44 = vector.shape_cast %43 : vector<8x8xbf16> to vector<1x8x8xbf16>
    %45 = vector.extract_strided_slice %38 {offsets = [0, 24], sizes = [8, 8], strides = [1, 1]} : vector<8x32xbf16> to vector<8x8xbf16>
    %46 = vector.shape_cast %45 : vector<8x8xbf16> to vector<1x8x8xbf16>
    %47 = tpu.concatenate %40, %42, %44, %46 in 0 : vector<1x8x8xbf16>, vector<1x8x8xbf16>, vector<1x8x8xbf16>, vector<1x8x8xbf16> -> vector<4x8x8xbf16>
    %48 = vector.extract_strided_slice %37 {offsets = [0, 32], sizes = [8, 32], strides = [1, 1]} : vector<8x96xbf16> to vector<8x32xbf16>
    %49 = vector.extract_strided_slice %48 {offsets = [0, 0], sizes = [8, 8], strides = [1, 1]} : vector<8x32xbf16> to vector<8x8xbf16>
    %50 = vector.shape_cast %49 : vector<8x8xbf16> to vector<1x8x8xbf16>
    %51 = vector.extract_strided_slice %48 {offsets = [0, 8], sizes = [8, 8], strides = [1, 1]} : vector<8x32xbf16> to vector<8x8xbf16>
    %52 = vector.shape_cast %51 : vector<8x8xbf16> to vector<1x8x8xbf16>
    %53 = vector.extract_strided_slice %48 {offsets = [0, 16], sizes = [8, 8], strides = [1, 1]} : vector<8x32xbf16> to vector<8x8xbf16>
    %54 = vector.shape_cast %53 : vector<8x8xbf16> to vector<1x8x8xbf16>
    %55 = vector.extract_strided_slice %48 {offsets = [0, 24], sizes = [8, 8], strides = [1, 1]} : vector<8x32xbf16> to vector<8x8xbf16>
    %56 = vector.shape_cast %55 : vector<8x8xbf16> to vector<1x8x8xbf16>
    %57 = tpu.concatenate %50, %52, %54, %56 in 0 : vector<1x8x8xbf16>, vector<1x8x8xbf16>, vector<1x8x8xbf16>, vector<1x8x8xbf16> -> vector<4x8x8xbf16>
    %58 = vector.extract_strided_slice %37 {offsets = [0, 64], sizes = [8, 32], strides = [1, 1]} : vector<8x96xbf16> to vector<8x32xbf16>
    %59 = vector.extract_strided_slice %58 {offsets = [0, 0], sizes = [8, 8], strides = [1, 1]} : vector<8x32xbf16> to vector<8x8xbf16>
    %60 = vector.shape_cast %59 : vector<8x8xbf16> to vector<1x8x8xbf16>
    %61 = vector.extract_strided_slice %58 {offsets = [0, 8], sizes = [8, 8], strides = [1, 1]} : vector<8x32xbf16> to vector<8x8xbf16>
    %62 = vector.shape_cast %61 : vector<8x8xbf16> to vector<1x8x8xbf16>
    %63 = vector.extract_strided_slice %58 {offsets = [0, 16], sizes = [8, 8], strides = [1, 1]} : vector<8x32xbf16> to vector<8x8xbf16>
    %64 = vector.shape_cast %63 : vector<8x8xbf16> to vector<1x8x8xbf16>
    %65 = vector.extract_strided_slice %58 {offsets = [0, 24], sizes = [8, 8], strides = [1, 1]} : vector<8x32xbf16> to vector<8x8xbf16>
    %66 = vector.shape_cast %65 : vector<8x8xbf16> to vector<1x8x8xbf16>
    %67 = tpu.concatenate %60, %62, %64, %66 in 0 : vector<1x8x8xbf16>, vector<1x8x8xbf16>, vector<1x8x8xbf16>, vector<1x8x8xbf16> -> vector<4x8x8xbf16>
    "tpu.trace_start"() <{level = 10 : i32, message = "bqd,bkd->bqk"}> : () -> ()
    %cst_14 = arith.constant dense<0.000000e+00> : vector<4x8x8xf32>
    %68 = tpu.matmul %47, %57, %cst_14 {dimension_numbers = #tpu.dot_dimension_numbers<[2], [2], [1], [1], [0, 0, 0, 1, 1, 1], [0], [0]>} : vector<4x8x8xbf16>, vector<4x8x8xbf16>, vector<4x8x8xf32> -> vector<4x8x8xf32>
    "tpu.trace_stop"() : () -> ()
    %cst_15 = arith.constant 0.353553385 : f32
    %69 = vector.broadcast %cst_15 : f32 to vector<4x8x8xf32>
    %70 = arith.mulf %68, %69 : vector<4x8x8xf32>
    %cst_16 = arith.constant dense<0xFF800000> : vector<4x8xf32>
    %71 = vector.multi_reduction <maximumf>, %70, %cst_16 [2] : vector<4x8x8xf32> to vector<4x8xf32>
    %72 = vector.shape_cast %71 : vector<4x8xf32> to vector<4x8x1xf32>
    %73 = vector.broadcast %72 : vector<4x8x1xf32> to vector<4x8x8xf32>
    %74 = arith.subf %70, %73 : vector<4x8x8xf32>
    %75 = math.exp %74 : vector<4x8x8xf32>
    %cst_17 = arith.constant dense<0.000000e+00> : vector<4x8xf32>
    %76 = vector.multi_reduction <add>, %75, %cst_17 [2] : vector<4x8x8xf32> to vector<4x8xf32>
    %77 = vector.shape_cast %76 : vector<4x8xf32> to vector<4x8x1xf32>
    %78 = tpu.reciprocal %77 {approx = true} : vector<4x8x1xf32> -> vector<4x8x1xf32>
    %79 = vector.broadcast %78 : vector<4x8x1xf32> to vector<4x8x8xf32>
    %80 = arith.mulf %75, %79 : vector<4x8x8xf32>
    %81 = arith.truncf %80 : vector<4x8x8xf32> to vector<4x8x8xbf16>
    "tpu.trace_start"() <{level = 10 : i32, message = "bqk,bkd->bqd"}> : () -> ()
    %cst_18 = arith.constant dense<0.000000e+00> : vector<4x8x8xf32>
    %82 = tpu.matmul %81, %67, %cst_18 {dimension_numbers = #tpu.dot_dimension_numbers<[2], [1], [1], [2], [0, 0, 0, 1, 1, 2], [0], [0]>} : vector<4x8x8xbf16>, vector<4x8x8xbf16>, vector<4x8x8xf32> -> vector<4x8x8xf32>
    "tpu.trace_stop"() : () -> ()
    %83 = arith.truncf %82 : vector<4x8x8xf32> to vector<4x8x8xbf16>
    %84 = vector.extract_strided_slice %83 {offsets = [0, 0, 0], sizes = [1, 8, 8], strides = [1, 1, 1]} : vector<4x8x8xbf16> to vector<1x8x8xbf16>
    %85 = vector.shape_cast %84 : vector<1x8x8xbf16> to vector<8x8xbf16>
    %86 = vector.extract_strided_slice %83 {offsets = [1, 0, 0], sizes = [1, 8, 8], strides = [1, 1, 1]} : vector<4x8x8xbf16> to vector<1x8x8xbf16>
    %87 = vector.shape_cast %86 : vector<1x8x8xbf16> to vector<8x8xbf16>
    %88 = vector.extract_strided_slice %83 {offsets = [2, 0, 0], sizes = [1, 8, 8], strides = [1, 1, 1]} : vector<4x8x8xbf16> to vector<1x8x8xbf16>
    %89 = vector.shape_cast %88 : vector<1x8x8xbf16> to vector<8x8xbf16>
    %90 = vector.extract_strided_slice %83 {offsets = [3, 0, 0], sizes = [1, 8, 8], strides = [1, 1, 1]} : vector<4x8x8xbf16> to vector<1x8x8xbf16>
    %91 = vector.shape_cast %90 : vector<1x8x8xbf16> to vector<8x8xbf16>
    %92 = tpu.concatenate %85, %87, %89, %91 in 1 : vector<8x8xbf16>, vector<8x8xbf16>, vector<8x8xbf16>, vector<8x8xbf16> -> vector<8x32xbf16>
    %c0_19 = arith.constant 0 : index
    %c0_20 = arith.constant 0 : index
    %93 = vector.load %arg6[%c0_19, %c0_20] : memref<32x32xbf16, #tpu.memory_space<vmem>>, vector<32x32xbf16>
    %cst_21 = arith.constant dense<0.000000e+00> : vector<8x32xf32>
    %94 = tpu.matmul %92, %93, %cst_21 {dimension_numbers = #tpu.dot_dimension_numbers<[1], [0], [0], [1], [0, 0, 1, 1], [], []>} : vector<8x32xbf16>, vector<32x32xbf16>, vector<8x32xf32> -> vector<8x32xf32>
    %c0_22 = arith.constant 0 : index
    %c0_23 = arith.constant 0 : index
    %95 = vector.load %arg7[%c0_22, %c0_23] : memref<1x32xf32, #tpu.memory_space<vmem>>, vector<1x32xf32>
    %96 = vector.shape_cast %95 : vector<1x32xf32> to vector<32xf32>
    %97 = vector.shape_cast %96 : vector<32xf32> to vector<1x32xf32>
    %98 = vector.broadcast %97 : vector<1x32xf32> to vector<8x32xf32>
    %99 = arith.addf %94, %98 : vector<8x32xf32>
    %100 = arith.addf %0, %99 : vector<8x32xf32>
    %c0_24 = arith.constant 0 : index
    %c0_25 = arith.constant 0 : index
    %101 = vector.load %arg8[%c0_24, %c0_25] : memref<1x32xf32, #tpu.memory_space<vmem>>, vector<1x32xf32>
    %102 = vector.shape_cast %101 : vector<1x32xf32> to vector<32xf32>
    %c0_26 = arith.constant 0 : index
    %c0_27 = arith.constant 0 : index
    %103 = vector.load %arg9[%c0_26, %c0_27] : memref<1x32xf32, #tpu.memory_space<vmem>>, vector<1x32xf32>
    %104 = vector.shape_cast %103 : vector<1x32xf32> to vector<32xf32>
    %cst_28 = arith.constant dense<0.000000e+00> : vector<8xf32>
    %105 = vector.multi_reduction <add>, %100, %cst_28 [1] : vector<8x32xf32> to vector<8xf32>
    %106 = vector.shape_cast %105 : vector<8xf32> to vector<8x1xf32>
    %cst_29 = arith.constant 3.200000e+01 : f32
    %107 = vector.broadcast %cst_29 : f32 to vector<8x1xf32>
    %108 = arith.divf %106, %107 : vector<8x1xf32>
    %109 = vector.broadcast %108 : vector<8x1xf32> to vector<8x32xf32>
    %110 = arith.subf %100, %109 : vector<8x32xf32>
    %111 = arith.mulf %110, %110 : vector<8x32xf32>
    %cst_30 = arith.constant dense<0.000000e+00> : vector<8xf32>
    %112 = vector.multi_reduction <add>, %111, %cst_30 [1] : vector<8x32xf32> to vector<8xf32>
    %113 = vector.shape_cast %112 : vector<8xf32> to vector<8x1xf32>
    %cst_31 = arith.constant 3.200000e+01 : f32
    %114 = vector.broadcast %cst_31 : f32 to vector<8x1xf32>
    %115 = arith.divf %113, %114 : vector<8x1xf32>
    %116 = vector.broadcast %108 : vector<8x1xf32> to vector<8x32xf32>
    %117 = arith.subf %100, %116 : vector<8x32xf32>
    %cst_32 = arith.constant 9.99999974E-6 : f32
    %118 = vector.broadcast %cst_32 : f32 to vector<8x1xf32>
    %119 = arith.addf %115, %118 : vector<8x1xf32>
    %120 = math.rsqrt %119 : vector<8x1xf32>
    %121 = vector.broadcast %120 : vector<8x1xf32> to vector<8x32xf32>
    %122 = arith.mulf %117, %121 : vector<8x32xf32>
    %123 = vector.shape_cast %102 : vector<32xf32> to vector<1x32xf32>
    %124 = vector.broadcast %123 : vector<1x32xf32> to vector<8x32xf32>
    %125 = arith.mulf %122, %124 : vector<8x32xf32>
    %126 = vector.shape_cast %104 : vector<32xf32> to vector<1x32xf32>
    %127 = vector.broadcast %126 : vector<1x32xf32> to vector<8x32xf32>
    %128 = arith.addf %125, %127 : vector<8x32xf32>
    %129 = arith.truncf %128 : vector<8x32xf32> to vector<8x32xbf16>
    %c0_33 = arith.constant 0 : index
    %c0_34 = arith.constant 0 : index
    %130 = vector.load %arg10[%c0_33, %c0_34] : memref<32x64xbf16, #tpu.memory_space<vmem>>, vector<32x64xbf16>
    %cst_35 = arith.constant dense<0.000000e+00> : vector<8x64xf32>
    %131 = tpu.matmul %129, %130, %cst_35 {dimension_numbers = #tpu.dot_dimension_numbers<[1], [0], [0], [1], [0, 0, 1, 1], [], []>} : vector<8x32xbf16>, vector<32x64xbf16>, vector<8x64xf32> -> vector<8x64xf32>
    %c0_36 = arith.constant 0 : index
    %c0_37 = arith.constant 0 : index
    %132 = vector.load %arg11[%c0_36, %c0_37] : memref<1x64xf32, #tpu.memory_space<vmem>>, vector<1x64xf32>
    %133 = vector.shape_cast %132 : vector<1x64xf32> to vector<64xf32>
    %134 = vector.shape_cast %133 : vector<64xf32> to vector<1x64xf32>
    %135 = vector.broadcast %134 : vector<1x64xf32> to vector<8x64xf32>
    %136 = arith.addf %131, %135 : vector<8x64xf32>
    %137 = arith.truncf %136 : vector<8x64xf32> to vector<8x64xbf16>
    %cst_38 = arith.constant 0.000000e+00 : bf16
    %138 = vector.broadcast %cst_38 : bf16 to vector<8x64xbf16>
    %139 = arith.maximumf %137, %138 : vector<8x64xbf16>
    %c0_39 = arith.constant 0 : index
    %c0_40 = arith.constant 0 : index
    %140 = vector.load %arg12[%c0_39, %c0_40] : memref<64x32xbf16, #tpu.memory_space<vmem>>, vector<64x32xbf16>
    %cst_41 = arith.constant dense<0.000000e+00> : vector<8x32xf32>
    %141 = tpu.matmul %139, %140, %cst_41 {dimension_numbers = #tpu.dot_dimension_numbers<[1], [0], [0], [1], [0, 0, 1, 1], [], []>} : vector<8x64xbf16>, vector<64x32xbf16>, vector<8x32xf32> -> vector<8x32xf32>
    %c0_42 = arith.constant 0 : index
    %c0_43 = arith.constant 0 : index
    %142 = vector.load %arg13[%c0_42, %c0_43] : memref<1x32xf32, #tpu.memory_space<vmem>>, vector<1x32xf32>
    %143 = vector.shape_cast %142 : vector<1x32xf32> to vector<32xf32>
    %144 = vector.shape_cast %143 : vector<32xf32> to vector<1x32xf32>
    %145 = vector.broadcast %144 : vector<1x32xf32> to vector<8x32xf32>
    %146 = arith.addf %141, %145 : vector<8x32xf32>
    %147 = arith.addf %100, %146 : vector<8x32xf32>
    %c0_44 = arith.constant 0 : index
    %c0_45 = arith.constant 0 : index
    %148 = vector.load %arg14[%c0_44, %c0_45] : memref<8x32xf32, #tpu.memory_space<vmem>>, vector<8x32xf32>
    tpu.vector_store %arg14[%c0_44, %c0_45], %147 {strides = array<i32>} : memref<8x32xf32, #tpu.memory_space<vmem>>, vector<8x32xf32>,
    return
  }
  func.func @transform_0(%arg0: i32) -> (i32, i32) {
    %c0_i32 = arith.constant 0 : i32
    %c0_i32_0 = arith.constant 0 : i32
    return %arg0, %c0_i32 : i32, i32
  }
  func.func @transform_1(%arg0: i32) -> (i32, i32) {
    %c0_i32 = arith.constant 0 : i32
    %c0_i32_0 = arith.constant 0 : i32
    %c0_i32_1 = arith.constant 0 : i32
    return %c0_i32, %c0_i32_0 : i32, i32
  }
  func.func @transform_2(%arg0: i32) -> (i32, i32) {
    %c0_i32 = arith.constant 0 : i32
    %c0_i32_0 = arith.constant 0 : i32
    %c0_i32_1 = arith.constant 0 : i32
    return %c0_i32, %c0_i32_0 : i32, i32
  }
  func.func @transform_3(%arg0: i32) -> (i32, i32) {
    %c0_i32 = arith.constant 0 : i32
    %c0_i32_0 = arith.constant 0 : i32
    %c0_i32_1 = arith.constant 0 : i32
    return %c0_i32, %c0_i32_0 : i32, i32
  }
  func.func @transform_4(%arg0: i32) -> (i32, i32) {
    %c0_i32 = arith.constant 0 : i32
    %c0_i32_0 = arith.constant 0 : i32
    %c0_i32_1 = arith.constant 0 : i32
    return %c0_i32, %c0_i32_0 : i32, i32
  }
  func.func @transform_5(%arg0: i32) -> (i32, i32) {
    %c0_i32 = arith.constant 0 : i32
    %c0_i32_0 = arith.constant 0 : i32
    %c0_i32_1 = arith.constant 0 : i32
    return %c0_i32, %c0_i32_0 : i32, i32
  }
  func.func @transform_6(%arg0: i32) -> (i32, i32) {
    %c0_i32 = arith.constant 0 : i32
    %c0_i32_0 = arith.constant 0 : i32
    %c0_i32_1 = arith.constant 0 : i32
    return %c0_i32, %c0_i32_0 : i32, i32
  }
  func.func @transform_7(%arg0: i32) -> (i32, i32) {
    %c0_i32 = arith.constant 0 : i32
    %c0_i32_0 = arith.constant 0 : i32
    %c0_i32_1 = arith.constant 0 : i32
    return %c0_i32, %c0_i32_0 : i32, i32
  }
  func.func @transform_8(%arg0: i32) -> (i32, i32) {
    %c0_i32 = arith.constant 0 : i32
    %c0_i32_0 = arith.constant 0 : i32
    %c0_i32_1 = arith.constant 0 : i32
    return %c0_i32, %c0_i32_0 : i32, i32
  }
  func.func @transform_9(%arg0: i32) -> (i32, i32) {
    %c0_i32 = arith.constant 0 : i32
    %c0_i32_0 = arith.constant 0 : i32
    %c0_i32_1 = arith.constant 0 : i32
    return %c0_i32, %c0_i32_0 : i32, i32
  }
  func.func @transform_10(%arg0: i32) -> (i32, i32) {
    %c0_i32 = arith.constant 0 : i32
    %c0_i32_0 = arith.constant 0 : i32
    %c0_i32_1 = arith.constant 0 : i32
    return %c0_i32, %c0_i32_0 : i32, i32
  }
  func.func @transform_11(%arg0: i32) -> (i32, i32) {
    %c0_i32 = arith.constant 0 : i32
    %c0_i32_0 = arith.constant 0 : i32
    %c0_i32_1 = arith.constant 0 : i32
    return %c0_i32, %c0_i32_0 : i32, i32
  }
  func.func @transform_12(%arg0: i32) -> (i32, i32) {
    %c0_i32 = arith.constant 0 : i32
    %c0_i32_0 = arith.constant 0 : i32
    %c0_i32_1 = arith.constant 0 : i32
    return %c0_i32, %c0_i32_0 : i32, i32
  }
  func.func @transform_13(%arg0: i32) -> (i32, i32) {
    %c0_i32 = arith.constant 0 : i32
    %c0_i32_0 = arith.constant 0 : i32
    return %arg0, %c0_i32 : i32, i32
  }
}

</mosaic_0001>

<llo_original>
// kernel: tpu_custom_call.1
$region0: #{tpu_custom_call.1}
  #allocation0 [shape = 'u32[]', space=smem, size = 0x4, offset = 0x4, fixed_abs, tag = 'smem constant byte address 0x4 - core index']
  #allocation1 [shape = 'u32[144,128]{1,0:T(1,128)}', space=vmem, size = 0x12000, scoped, tag = 'internal scratch']
  %s0 = inlined_call_operand.vmem [shape: f32[16,32], index: 0, kind: input, shape index: {}]
  %s1 = inlined_call_operand.vmem [shape: f32[1,32], index: 1, kind: input, shape index: {}]
  %s2 = inlined_call_operand.vmem [shape: f32[1,32], index: 2, kind: input, shape index: {}]
  %s3 = inlined_call_operand.vmem [shape: bf16[32,96], index: 3, kind: input, shape index: {}]
  %s4 = inlined_call_operand.vmem [shape: f32[1,96], index: 4, kind: input, shape index: {}]
  %s5 = inlined_call_operand.vmem [shape: bf16[32,32], index: 5, kind: input, shape index: {}]
  %s6 = inlined_call_operand.vmem [shape: f32[1,32], index: 6, kind: input, shape index: {}]
  %s7 = inlined_call_operand.hbm [shape: f32[1,32], index: 7, kind: input, shape index: {}]
  %s8 = inlined_call_operand.hbm [shape: f32[1,32], index: 8, kind: input, shape index: {}]
  %s9 = inlined_call_operand.hbm [shape: bf16[32,64], index: 9, kind: input, shape index: {}]
  %s10 = inlined_call_operand.hbm [shape: f32[1,64], index: 10, kind: input, shape index: {}]
  %s11 = inlined_call_operand.vmem [shape: bf16[64,32], index: 11, kind: input, shape index: {}]
  %s12 = inlined_call_operand.vmem [shape: f32[1,32], index: 12, kind: input, shape index: {}]
  %s13 = inlined_call_operand.hbm [shape: f32[16,32], index: 13, kind: output, shape index: {}]
  %s14 = sld [smem:[#allocation0]]
  $region101: #{tpu_custom_call.1} parent=0
    _
  %s16 = ssub.s32 1, %s14
  %s17 = scalar_select 0, %s16, %s14
  $region1: #{tpu_custom_call.1} parent=0
    #allocation2 [shape = 'u8[512]{0}', space=vmem, size = 0x400, scoped, tag = 'input window, operand 7, single buffered']
    #allocation3 [shape = 's32[2]{0}', space=sflag, size = 0x8, scoped, tag = 'scoped memory for tpu_custom_call.1']
    #allocation4 [shape = 's32[2]{0}', space=sflag, size = 0x8, scoped, tag = 'scoped memory for tpu_custom_call.1']
    #allocation5 [shape = 'u8[512]{0}', space=vmem, size = 0x400, scoped, tag = 'input window, operand 8, single buffered']
    #allocation6 [shape = 's32[1]{0}', space=sflag, size = 0x4, scoped, tag = 'scoped memory for tpu_custom_call.1']
    #allocation7 [shape = 'u8[8192]{0}', space=vmem, size = 0x2000, scoped, tag = 'input window, operand 9, single buffered']
    #allocation8 [shape = 'u8[512]{0}', space=vmem, size = 0x400, scoped, tag = 'input window, operand 10, single buffered']
    #allocation9 [shape = 's32[1]{0}', space=sflag, size = 0x4, scoped, tag = 'scoped memory for tpu_custom_call.1']
    #allocation10 [shape = 'u8[8192]{0}', space=vmem, size = 0x2000, scoped, tag = 'output window, operand 0']
    %18 = vsyncpa [#allocation3], 0
    %19 = vsyncpa [#allocation6], 0
    %20 = vsyncpa [#allocation9], 0
    %21 = vsyncpa [#allocation4], 0
    %s22 = scalar_lea.sflag [#allocation4], 1
    %23 = vsyncpa %s22, 0
    loop: start=0, step=1, limit=4
    $region2: #{tpu_custom_call.1} parent=1 // loop_pre_header
      _
    $region3: #{tpu_custom_call.1} parent=1 // loop_header
      %s25 = sphi 0, %s29
      %p26 = scmp.ge.s32.totalorder %s25, 4
      %s35 = sphi 0, %s37
      %s38 = sphi 0, %s35
      %s39 = sphi 0, %s38
      %s55 = sphi 0, %s39
      %s59 = sphi 0, %s59
      %s61 = sphi 0, %s59
      %s62 = sphi 0, %s61
      %s76 = sphi 0, %s62
      %s80 = sphi 0, %s80
      %s82 = sphi 0, %s80
      %s83 = sphi 0, %s82
      %s97 = sphi 0, %s83
      %s101 = sphi 0, %s101
      %s103 = sphi 0, %s101
      %s104 = sphi 0, %s103
      %s118 = sphi 0, %s104
      %s122 = sphi 0, %s122
      %s124 = sphi 0, %s122
      %s125 = sphi 0, %s124
      %s139 = sphi 0, %s125
      %s143 = sphi 0, %s143
      %s145 = sphi 0, %s143
      %s146 = sphi 0, %s145
      %s160 = sphi 0, %s146
      %s164 = sphi 0, %s164
      %s166 = sphi 0, %s164
      %s167 = sphi 0, %s166
      %s181 = sphi 0, %s167
      %s185 = sphi 0, %s185
      %s187 = sphi 0, %s185
      %s188 = sphi 0, %s187
      %s202 = sphi 0, %s188
      %s206 = sphi 0, %s206
      %s208 = sphi 0, %s206
      %s209 = sphi 0, %s208
      %s223 = sphi 0, %s209
      %s227 = sphi 0, %s227
      %s229 = sphi 0, %s227
      %s230 = sphi 0, %s229
      %s244 = sphi 0, %s230
      %s248 = sphi 0, %s248
      %s250 = sphi 0, %s248
      %s251 = sphi 0, %s250
      %s265 = sphi 0, %s251
      %s269 = sphi 0, %s269
      %s271 = sphi 0, %s269
      %s272 = sphi 0, %s271
      %s286 = sphi 0, %s272
      %s290 = sphi 0, %s290
      %s292 = sphi 0, %s290
      %s293 = sphi 0, %s292
      %s307 = sphi 0, %s293
      %s313 = sphi 0, %s315
      %s316 = sphi 0, %s313
      %s317 = sphi 0, %s316
      %s333 = sphi 0, %s317
    $region4: #{tpu_custom_call.1} parent=1 // loop_header_branch
      %28 = sbr.rel (%p26) target = $region8
    $region5: #{tpu_custom_call.1} parent=1 // loop_body
      %s30 = ssub.s32 %s25, 1
      %s31 = ssub.s32 %s25, 2
      %s32 = sadd.s32 %s25, 1
      %s33 = ssub.s32 %s25, %s32
      %p34 = scmp.eq.s32.totalorder %s33, 0
      %s36 = sadd.s32 %s35, 1
      %s37 = scalar_select %p34, %s35, %s36
      %p40 = pneg %p34
      %p41 = scmp.eq.s32.totalorder %s25, 1
      %p42 = por %p40, %p41
      %p43 = scmp.ne.s32.totalorder %s35, %s38
      %p44 = scmp.eq.s32.totalorder %s25, 0
      %p45 = por %p43, %p44
      %p46 = scmp.ne.s32.totalorder %s35, %s38
      %p47 = scmp.eq.s32.totalorder %s30, 1
      %p48 = por %p46, %p47
      %p49 = scmp.ne.s32.totalorder %s38, %s39
      %p50 = scmp.eq.s32.totalorder %s30, 0
      %p51 = por %p49, %p50
      %p52 = scmp.ne.s32.totalorder %s38, %s39
      %p53 = scmp.eq.s32.totalorder %s31, 1
      %p54 = por %p52, %p53
      %p56 = scmp.ne.s32.totalorder %s39, %s55
      %p57 = scmp.eq.s32.totalorder %s31, 0
      %p58 = por %p56, %p57
      %s60 = sadd.s32 %s59, 1
      %p63 = scmp.eq.s32.totalorder %s25, 1
      %p64 = scmp.ne.s32.totalorder %s59, %s61
      %p65 = scmp.eq.s32.totalorder %s25, 0
      %p66 = por %p64, %p65
      %p67 = scmp.ne.s32.totalorder %s59, %s61
      %p68 = scmp.eq.s32.totalorder %s30, 1
      %p69 = por %p67, %p68
      %p70 = scmp.ne.s32.totalorder %s61, %s62
      %p71 = scmp.eq.s32.totalorder %s30, 0
      %p72 = por %p70, %p71
      %p73 = scmp.ne.s32.totalorder %s61, %s62
      %p74 = scmp.eq.s32.totalorder %s31, 1
      %p75 = por %p73, %p74
      %p77 = scmp.ne.s32.totalorder %s62, %s76
      %p78 = scmp.eq.s32.totalorder %s31, 0
      %p79 = por %p77, %p78
      %s81 = sadd.s32 %s80, 1
      %p84 = scmp.eq.s32.totalorder %s25, 1
      %p85 = scmp.ne.s32.totalorder %s80, %s82
      %p86 = scmp.eq.s32.totalorder %s25, 0
      %p87 = por %p85, %p86
      %p88 = scmp.ne.s32.totalorder %s80, %s82
      %p89 = scmp.eq.s32.totalorder %s30, 1
      %p90 = por %p88, %p89
      %p91 = scmp.ne.s32.totalorder %s82, %s83
      %p92 = scmp.eq.s32.totalorder %s30, 0
      %p93 = por %p91, %p92
      %p94 = scmp.ne.s32.totalorder %s82, %s83
      %p95 = scmp.eq.s32.totalorder %s31, 1
      %p96 = por %p94, %p95
      %p98 = scmp.ne.s32.totalorder %s83, %s97
      %p99 = scmp.eq.s32.totalorder %s31, 0
      %p100 = por %p98, %p99
      %s102 = sadd.s32 %s101, 1
      %p105 = scmp.eq.s32.totalorder %s25, 1
      %p106 = scmp.ne.s32.totalorder %s101, %s103
      %p107 = scmp.eq.s32.totalorder %s25, 0
      %p108 = por %p106, %p107
      %p109 = scmp.ne.s32.totalorder %s101, %s103
      %p110 = scmp.eq.s32.totalorder %s30, 1
      %p111 = por %p109, %p110
      %p112 = scmp.ne.s32.totalorder %s103, %s104
      %p113 = scmp.eq.s32.totalorder %s30, 0
      %p114 = por %p112, %p113
      %p115 = scmp.ne.s32.totalorder %s103, %s104
      %p116 = scmp.eq.s32.totalorder %s31, 1
      %p117 = por %p115, %p116
      %p119 = scmp.ne.s32.totalorder %s104, %s118
      %p120 = scmp.eq.s32.totalorder %s31, 0
      %p121 = por %p119, %p120
      %s123 = sadd.s32 %s122, 1
      %p126 = scmp.eq.s32.totalorder %s25, 1
      %p127 = scmp.ne.s32.totalorder %s122, %s124
      %p128 = scmp.eq.s32.totalorder %s25, 0
      %p129 = por %p127, %p128
      %p130 = scmp.ne.s32.totalorder %s122, %s124
      %p131 = scmp.eq.s32.totalorder %s30, 1
      %p132 = por %p130, %p131
      %p133 = scmp.ne.s32.totalorder %s124, %s125
      %p134 = scmp.eq.s32.totalorder %s30, 0
      %p135 = por %p133, %p134
      %p136 = scmp.ne.s32.totalorder %s124, %s125
      %p137 = scmp.eq.s32.totalorder %s31, 1
      %p138 = por %p136, %p137
      %p140 = scmp.ne.s32.totalorder %s125, %s139
      %p141 = scmp.eq.s32.totalorder %s31, 0
      %p142 = por %p140, %p141
      %s144 = sadd.s32 %s143, 1
      %p147 = scmp.eq.s32.totalorder %s25, 1
      %p148 = scmp.ne.s32.totalorder %s143, %s145
      %p149 = scmp.eq.s32.totalorder %s25, 0
      %p150 = por %p148, %p149
      %p151 = scmp.ne.s32.totalorder %s143, %s145
      %p152 = scmp.eq.s32.totalorder %s30, 1
      %p153 = por %p151, %p152
      %p154 = scmp.ne.s32.totalorder %s145, %s146
      %p155 = scmp.eq.s32.totalorder %s30, 0
      %p156 = por %p154, %p155
      %p157 = scmp.ne.s32.totalorder %s145, %s146
      %p158 = scmp.eq.s32.totalorder %s31, 1
      %p159 = por %p157, %p158
      %p161 = scmp.ne.s32.totalorder %s146, %s160
      %p162 = scmp.eq.s32.totalorder %s31, 0
      %p163 = por %p161, %p162
      %s165 = sadd.s32 %s164, 1
      %p168 = scmp.eq.s32.totalorder %s25, 1
      %p169 = scmp.ne.s32.totalorder %s164, %s166
      %p170 = scmp.eq.s32.totalorder %s25, 0
      %p171 = por %p169, %p170
      %p172 = scmp.ne.s32.totalorder %s164, %s166
      %p173 = scmp.eq.s32.totalorder %s30, 1
      %p174 = por %p172, %p173
      %p175 = scmp.ne.s32.totalorder %s166, %s167
      %p176 = scmp.eq.s32.totalorder %s30, 0
      %p177 = por %p175, %p176
      %p178 = scmp.ne.s32.totalorder %s166, %s167
      %p179 = scmp.eq.s32.totalorder %s31, 1
      %p180 = por %p178, %p179
      %p182 = scmp.ne.s32.totalorder %s167, %s181
      %p183 = scmp.eq.s32.totalorder %s31, 0
      %p184 = por %p182, %p183
      %s186 = sadd.s32 %s185, 1
      %p189 = scmp.eq.s32.totalorder %s25, 1
      %p190 = scmp.ne.s32.totalorder %s185, %s187
      %p191 = scmp.eq.s32.totalorder %s25, 0
      %p192 = por %p190, %p191
      %p193 = scmp.ne.s32.totalorder %s185, %s187
      %p194 = scmp.eq.s32.totalorder %s30, 1
      %p195 = por %p193, %p194
      %p196 = scmp.ne.s32.totalorder %s187, %s188
      %p197 = scmp.eq.s32.totalorder %s30, 0
      %p198 = por %p196, %p197
      %p199 = scmp.ne.s32.totalorder %s187, %s188
      %p200 = scmp.eq.s32.totalorder %s31, 1
      %p201 = por %p199, %p200
      %p203 = scmp.ne.s32.totalorder %s188, %s202
      %p204 = scmp.eq.s32.totalorder %s31, 0
      %p205 = por %p203, %p204
      %s207 = sadd.s32 %s206, 1
      %p210 = scmp.eq.s32.totalorder %s25, 1
      %p211 = scmp.ne.s32.totalorder %s206, %s208
      %p212 = scmp.eq.s32.totalorder %s25, 0
      %p213 = por %p211, %p212
      %p214 = scmp.ne.s32.totalorder %s206, %s208
      %p215 = scmp.eq.s32.totalorder %s30, 1
      %p216 = por %p214, %p215
      %p217 = scmp.ne.s32.totalorder %s208, %s209
      %p218 = scmp.eq.s32.totalorder %s30, 0
      %p219 = por %p217, %p218
      %p220 = scmp.ne.s32.totalorder %s208, %s209
      %p221 = scmp.eq.s32.totalorder %s31, 1
      %p222 = por %p220, %p221
      %p224 = scmp.ne.s32.totalorder %s209, %s223
      %p225 = scmp.eq.s32.totalorder %s31, 0
      %p226 = por %p224, %p225
      %s228 = sadd.s32 %s227, 1
      %p231 = scmp.eq.s32.totalorder %s25, 1
      %p232 = scmp.ne.s32.totalorder %s227, %s229
      %p233 = scmp.eq.s32.totalorder %s25, 0
      %p234 = por %p232, %p233
      %p235 = scmp.ne.s32.totalorder %s227, %s229
      %p236 = scmp.eq.s32.totalorder %s30, 1
      %p237 = por %p235, %p236
      %p238 = scmp.ne.s32.totalorder %s229, %s230
      %p239 = scmp.eq.s32.totalorder %s30, 0
      %p240 = por %p238, %p239
      %p241 = scmp.ne.s32.totalorder %s229, %s230
      %p242 = scmp.eq.s32.totalorder %s31, 1
      %p243 = por %p241, %p242
      %p245 = scmp.ne.s32.totalorder %s230, %s244
      %p246 = scmp.eq.s32.totalorder %s31, 0
      %p247 = por %p245, %p246
      %s249 = sadd.s32 %s248, 1
      %p252 = scmp.eq.s32.totalorder %s25, 1
      %p253 = scmp.ne.s32.totalorder %s248, %s250
      %p254 = scmp.eq.s32.totalorder %s25, 0
      %p255 = por %p253, %p254
      %p256 = scmp.ne.s32.totalorder %s248, %s250
      %p257 = scmp.eq.s32.totalorder %s30, 1
      %p258 = por %p256, %p257
      %p259 = scmp.ne.s32.totalorder %s250, %s251
      %p260 = scmp.eq.s32.totalorder %s30, 0
      %p261 = por %p259, %p260
      %p262 = scmp.ne.s32.totalorder %s250, %s251
      %p263 = scmp.eq.s32.totalorder %s31, 1
      %p264 = por %p262, %p263
      %p266 = scmp.ne.s32.totalorder %s251, %s265
      %p267 = scmp.eq.s32.totalorder %s31, 0
      %p268 = por %p266, %p267
      %s270 = sadd.s32 %s269, 1
      %p273 = scmp.eq.s32.totalorder %s25, 1
      %p274 = scmp.ne.s32.totalorder %s269, %s271
      %p275 = scmp.eq.s32.totalorder %s25, 0
      %p276 = por %p274, %p275
      %p277 = scmp.ne.s32.totalorder %s269, %s271
      %p278 = scmp.eq.s32.totalorder %s30, 1
      %p279 = por %p277, %p278
      %p280 = scmp.ne.s32.totalorder %s271, %s272
      %p281 = scmp.eq.s32.totalorder %s30, 0
      %p282 = por %p280, %p281
      %p283 = scmp.ne.s32.totalorder %s271, %s272
      %p284 = scmp.eq.s32.totalorder %s31, 1
      %p285 = por %p283, %p284
      %p287 = scmp.ne.s32.totalorder %s272, %s286
      %p288 = scmp.eq.s32.totalorder %s31, 0
      %p289 = por %p287, %p288
      %s291 = sadd.s32 %s290, 1
      %p294 = scmp.eq.s32.totalorder %s25, 1
      %p295 = scmp.ne.s32.totalorder %s290, %s292
      %p296 = scmp.eq.s32.totalorder %s25, 0
      %p297 = por %p295, %p296
      %p298 = scmp.ne.s32.totalorder %s290, %s292
      %p299 = scmp.eq.s32.totalorder %s30, 1
      %p300 = por %p298, %p299
      %p301 = scmp.ne.s32.totalorder %s292, %s293
      %p302 = scmp.eq.s32.totalorder %s30, 0
      %p303 = por %p301, %p302
      %p304 = scmp.ne.s32.totalorder %s292, %s293
      %p305 = scmp.eq.s32.totalorder %s31, 1
      %p306 = por %p304, %p305
      %p308 = scmp.ne.s32.totalorder %s293, %s307
      %p309 = scmp.eq.s32.totalorder %s31, 0
      %p310 = por %p308, %p309
      %s311 = ssub.s32 %s25, %s32
      %p312 = scmp.eq.s32.totalorder %s311, 0
      %s314 = sadd.s32 %s313, 1
      %s315 = scalar_select %p312, %s313, %s314
      %p318 = pneg %p312
      %p319 = scmp.eq.s32.totalorder %s25, 1
      %p320 = por %p318, %p319
      %p321 = scmp.ne.s32.totalorder %s313, %s316
      %p322 = scmp.eq.s32.totalorder %s25, 0
      %p323 = por %p321, %p322
      %p324 = scmp.ne.s32.totalorder %s313, %s316
      %p325 = scmp.eq.s32.totalorder %s30, 1
      %p326 = por %p324, %p325
      %p327 = scmp.ne.s32.totalorder %s316, %s317
      %p328 = scmp.eq.s32.totalorder %s30, 0
      %p329 = por %p327, %p328
      %p330 = scmp.ne.s32.totalorder %s316, %s317
      %p331 = scmp.eq.s32.totalorder %s31, 1
      %p332 = por %p330, %p331
      %p334 = scmp.ne.s32.totalorder %s317, %s333
      %p335 = scmp.eq.s32.totalorder %s31, 0
      %p336 = por %p334, %p335
      %p337 = scmp.le.s32.totalorder 1, %s25
      %p338 = scmp.lt.s32.totalorder %s25, 3
      %p339 = pnand %p337, %p338
      %p340 = pneg %p339
      // Predicated region
      $region9: #{tpu_custom_call.1} parent=5 // pred_check
        _
      $region10: #{tpu_custom_call.1} parent=5 // pred_check_branch
        %342 = sbr.rel (%p339) target = $region12
      $region11: #{tpu_custom_call.1} parent=5 // pred_region
        %s343 = ssub.s32 %s25, 1
        // Predicated region
        $region13: #{tpu_custom_call.1} parent=11 // pred_check
          %p344 = pneg %p72
        $region14: #{tpu_custom_call.1} parent=11 // pred_check_branch
          %346 = sbr.rel (%p344) target = $region16
        $region15: #{tpu_custom_call.1} parent=11 // pred_region
          _
        $region16: #{tpu_custom_call.1} parent=11 // pred_fallthru
          _
        // Predicated region
        $region17: #{tpu_custom_call.1} parent=11 // pred_check
          %p347 = pneg %p93
        $region18: #{tpu_custom_call.1} parent=11 // pred_check_branch
          %349 = sbr.rel (%p347) target = $region20
        $region19: #{tpu_custom_call.1} parent=11 // pred_region
          _
        $region20: #{tpu_custom_call.1} parent=11 // pred_fallthru
          _
        // Predicated region
        $region21: #{tpu_custom_call.1} parent=11 // pred_check
          %p350 = pneg %p114
        $region22: #{tpu_custom_call.1} parent=11 // pred_check_branch
          %352 = sbr.rel (%p350) target = $region24
        $region23: #{tpu_custom_call.1} parent=11 // pred_region
          _
        $region24: #{tpu_custom_call.1} parent=11 // pred_fallthru
          _
        // Predicated region
        $region25: #{tpu_custom_call.1} parent=11 // pred_check
          %p353 = pneg %p135
        $region26: #{tpu_custom_call.1} parent=11 // pred_check_branch
          %355 = sbr.rel (%p353) target = $region28
        $region27: #{tpu_custom_call.1} parent=11 // pred_region
          _
        $region28: #{tpu_custom_call.1} parent=11 // pred_fallthru
          _
        // Predicated region
        $region29: #{tpu_custom_call.1} parent=11 // pred_check
          %p356 = pneg %p156
        $region30: #{tpu_custom_call.1} parent=11 // pred_check_branch
          %358 = sbr.rel (%p356) target = $region32
        $region31: #{tpu_custom_call.1} parent=11 // pred_region
          _
        $region32: #{tpu_custom_call.1} parent=11 // pred_fallthru
          _
        // Predicated region
        $region33: #{tpu_custom_call.1} parent=11 // pred_check
          %p359 = pneg %p177
        $region34: #{tpu_custom_call.1} parent=11 // pred_check_branch
          %361 = sbr.rel (%p359) target = $region36
        $region35: #{tpu_custom_call.1} parent=11 // pred_region
          _
        $region36: #{tpu_custom_call.1} parent=11 // pred_fallthru
          _
        // Predicated region
        $region37: #{tpu_custom_call.1} parent=11 // pred_check
          %p362 = pneg %p198
        $region38: #{tpu_custom_call.1} parent=11 // pred_check_branch
          %364 = sbr.rel (%p362) target = $region40
        $region39: #{tpu_custom_call.1} parent=11 // pred_region
          %s366 = ssub.s32 16, 16
          %367 = vsyncadd [#allocation3], %s366
          %s369 = sshll.u32 [#allocation2], 4
          %s370 = int_to_ptr.vmem [resolvable:$true] %s369
          %372 = dma.hbm_to_vmem [thread:$0]  %s7, 16, %s370, [#allocation3]
        $region40: #{tpu_custom_call.1} parent=11 // pred_fallthru
          _
        // Predicated region
        $region41: #{tpu_custom_call.1} parent=11 // pred_check
          %p373 = pneg %p219
        $region42: #{tpu_custom_call.1} parent=11 // pred_check_branch
          %375 = sbr.rel (%p373) target = $region44
        $region43: #{tpu_custom_call.1} parent=11 // pred_region
          %s377 = ssub.s32 16, 16
          %378 = vsyncadd [#allocation6], %s377
          %s380 = sshll.u32 [#allocation5], 4
          %s381 = int_to_ptr.vmem [resolvable:$true] %s380
          %383 = dma.hbm_to_vmem [thread:$0]  %s8, 16, %s381, [#allocation6]
        $region44: #{tpu_custom_call.1} parent=11 // pred_fallthru
          _
        // Predicated region
        $region45: #{tpu_custom_call.1} parent=11 // pred_check
          %p384 = pneg %p240
        $region46: #{tpu_custom_call.1} parent=11 // pred_check_branch
          %386 = sbr.rel (%p384) target = $region48
        $region47: #{tpu_custom_call.1} parent=11 // pred_region
          %s388 = ssub.s32 256, 256
          %389 = vsyncadd [#allocation6], %s388
          %s390 = sshll.u32 [#allocation7], 4
          %s391 = int_to_ptr.vmem [resolvable:$true] %s390
          %396 = dma.hbm_to_vmem [thread:$0]  %s9, 256, %s391, [#allocation6], 64, 64, 4
        $region48: #{tpu_custom_call.1} parent=11 // pred_fallthru
          _
        // Predicated region
        $region49: #{tpu_custom_call.1} parent=11 // pred_check
          %p397 = pneg %p261
        $region50: #{tpu_custom_call.1} parent=11 // pred_check_branch
          %399 = sbr.rel (%p397) target = $region52
        $region51: #{tpu_custom_call.1} parent=11 // pred_region
          %s401 = ssub.s32 16, 16
          %402 = vsyncadd [#allocation9], %s401
          %s404 = sshll.u32 [#allocation8], 4
          %s405 = int_to_ptr.vmem [resolvable:$true] %s404
          %407 = dma.hbm_to_vmem [thread:$0]  %s10, 16, %s405, [#allocation9]
        $region52: #{tpu_custom_call.1} parent=11 // pred_fallthru
          _
        // Predicated region
        $region53: #{tpu_custom_call.1} parent=11 // pred_check
          %p408 = pneg %p282
        $region54: #{tpu_custom_call.1} parent=11 // pred_check_branch
          %410 = sbr.rel (%p408) target = $region56
        $region55: #{tpu_custom_call.1} parent=11 // pred_region
          _
        $region56: #{tpu_custom_call.1} parent=11 // pred_fallthru
          _
        // Predicated region
        $region57: #{tpu_custom_call.1} parent=11 // pred_check
          %p411 = pneg %p303
        $region58: #{tpu_custom_call.1} parent=11 // pred_check_branch
          %413 = sbr.rel (%p411) target = $region60
        $region59: #{tpu_custom_call.1} parent=11 // pred_region
          _
        $region60: #{tpu_custom_call.1} parent=11 // pred_fallthru
          _
      $region12: #{tpu_custom_call.1} parent=5 // pred_fallthru
        _
      %p414 = scmp.lt.s32.totalorder %s25, 2
      // Predicated region
      $region61: #{tpu_custom_call.1} parent=5 // pred_check
        %p415 = pneg %p414
      $region62: #{tpu_custom_call.1} parent=5 // pred_check_branch
        %417 = sbr.rel (%p415) target = $region64
      $region63: #{tpu_custom_call.1} parent=5 // pred_region
        // Predicated region
        $region65: #{tpu_custom_call.1} parent=63 // pred_check
          %p418 = pneg %p45
        $region66: #{tpu_custom_call.1} parent=63 // pred_check_branch
          %420 = sbr.rel (%p418) target = $region68
        $region67: #{tpu_custom_call.1} parent=63 // pred_region
          %p421 = scmp.lt.s32.totalorder %s25, 1
          %s422 = scalar_select %p421, %s25, 1
          %s423 = smul.addr %s422, 8
          %s424 = scalar_lea.vmem %s0, %s423
        $region68: #{tpu_custom_call.1} parent=63 // pred_fallthru
          _
      $region64: #{tpu_custom_call.1} parent=5 // pred_fallthru
        _
      %p425 = scmp.le.s32.totalorder 1, %s25
      %p426 = scmp.lt.s32.totalorder %s25, 3
      %p427 = pnand %p425, %p426
      %p428 = pneg %p427
      // Predicated region
      $region69: #{tpu_custom_call.1} parent=5 // pred_check
        _
      $region70: #{tpu_custom_call.1} parent=5 // pred_check_branch
        %430 = sbr.rel (%p427) target = $region72
      $region71: #{tpu_custom_call.1} parent=5 // pred_region
        %s431 = ssub.s32 %s25, 1
        // Predicated region
        $region73: #{tpu_custom_call.1} parent=71 // pred_check
          %p432 = pneg %p198
        $region74: #{tpu_custom_call.1} parent=71 // pred_check_branch
          %434 = sbr.rel (%p432) target = $region76
        $region75: #{tpu_custom_call.1} parent=71 // pred_region
          %435 = dma.done [#allocation3], 16
        $region76: #{tpu_custom_call.1} parent=71 // pred_fallthru
          _
        // Predicated region
        $region77: #{tpu_custom_call.1} parent=71 // pred_check
          %p436 = pneg %p219
        $region78: #{tpu_custom_call.1} parent=71 // pred_check_branch
          %438 = sbr.rel (%p436) target = $region80
        $region79: #{tpu_custom_call.1} parent=71 // pred_region
          %439 = dma.done [#allocation6], 16
        $region80: #{tpu_custom_call.1} parent=71 // pred_fallthru
          _
        // Predicated region
        $region81: #{tpu_custom_call.1} parent=71 // pred_check
          %p440 = pneg %p240
        $region82: #{tpu_custom_call.1} parent=71 // pred_check_branch
          %442 = sbr.rel (%p440) target = $region84
        $region83: #{tpu_custom_call.1} parent=71 // pred_region
          %443 = dma.done [#allocation6], 256
        $region84: #{tpu_custom_call.1} parent=71 // pred_fallthru
          _
        // Predicated region
        $region85: #{tpu_custom_call.1} parent=71 // pred_check
          %p444 = pneg %p261
        $region86: #{tpu_custom_call.1} parent=71 // pred_check_branch
          %446 = sbr.rel (%p444) target = $region88
        $region87: #{tpu_custom_call.1} parent=71 // pred_region
          %447 = dma.done [#allocation9], 16
        $region88: #{tpu_custom_call.1} parent=71 // pred_fallthru
          _
        %p448 = scmp.lt.s32.totalorder %s30, 1
        %s449 = scalar_select %p448, %s30, 1
        %s450 = smul.addr %s449, 8
        %s451 = scalar_lea.vmem %s0, %s450
        %p452 = pneg %p51
        %p453 = pneg %p48
        %p454 = pneg %p72
        %p455 = pneg %p69
        %p456 = pneg %p93
        %p457 = pneg %p90
        %p458 = pneg %p114
        %p459 = pneg %p111
        %p460 = pneg %p135
        %p461 = pneg %p132
        %p462 = pneg %p156
        %p463 = pneg %p153
        %p464 = pneg %p177
        %p465 = pneg %p174
        %p466 = pneg %p198
        %p467 = pneg %p195
        %p468 = pneg %p219
        %p469 = pneg %p216
        %p470 = pneg %p240
        %p471 = pneg %p237
        %p472 = pneg %p261
        %p473 = pneg %p258
        %p474 = pneg %p282
        %p475 = pneg %p279
        %p476 = pneg %p303
        %p477 = pneg %p300
        %p478 = pneg %p329
        %p479 = pneg %p326
        %s480 = sand.u32 %s316, 1
        %s481 = scalar_lea.sflag [#allocation4], %s480
        %s482 = sand.u32 %s316, 1
        %s483 = smul.addr %s482, 8
        %s484 = scalar_lea.vmem [#allocation10], %s483
        %p485 = scmp.lt.s32.totalorder %s30, 1
        %s486 = scalar_select %p485, %s30, 1
        %s487 = smul.addr %s486, 8
        %s488 = scalar_lea.vmem %s0, %s487
        %v490 = vld [vmem:[%s488] sm:$0xff]
        %v491 = vld [vmem:[%s1] sm:$0x1]
        %v492 = vld [vmem:[%s2] sm:$0x1]
        %vm493 = vcmask 261120
        %v494 = vsel %vm493, %v490, 0.0
        %495 = vadd.xlane.f32.xlu0 %v494
        %v496 = vpop.xlane.xlu0 %495
        %v497 = vrcp.pop 32.0
        %v498 = vmul.f32 %v496, %v497
        %v499 = vsub.f32 %v490, %v498
        %v500 = vmul.f32 %v499, %v499
        %v501 = vsel %vm493, %v500, 0.0
        %502 = vadd.xlane.f32.xlu0 %v501
        %v503 = vpop.xlane.xlu0 %502
        %v504 = vmul.f32 %v503, %v497
        %v505 = vadd.f32 %v504, 1e-05
        %v506 = vrsqrt.pop %v505
        %v507 = vmul.f32 %v499, %v506
        %v509 = vlaneseq
        %v510 = vshrl.u32 %v509, 7
        %v511 = vsub.s32 0, %v510
        %v512 = vrot.slane %v491, %v511
        %v514 = vmul.f32 %v507, %v512
        %v516 = vlaneseq
        %v517 = vshrl.u32 %v516, 7
        %v518 = vsub.s32 0, %v517
        %v519 = vrot.slane %v492, %v518
        %v521 = vadd.f32 %v514, %v519
        %v522 = vpack.c.bf16 %v521, %v521
        %v523 = vld [vmem:[%s3] sm:$0xf]
        %v524 = vld [vmem:[%s3 + $0x4] sm:$0xf]
        %v525 = vld [vmem:[%s3 + $0x8] sm:$0xf]
        %v526 = vld [vmem:[%s3 + $0xc] sm:$0xf]
        %v527 = vld [vmem:[%s4] sm:$0x1]
        %v529 = vlaneseq
        %v530 = vshrl.u32 %v529, 7
        %v531 = vsub.s32 0, %v530
        %v532 = vrot.slane %v527, %v531
        %v538 = vunpack.c.l.b16 %v523
        %v539 = vunpack.c.l.b16 %v524
        %v540 = vunpack.c.l.b16 %v525
        %v541 = vunpack.c.l.b16 %v526
        %v542 = vpack.c.b16 %v539, %v538
        %v543 = vpack.c.b16 %v541, %v540
        %v547 = vsel %vm493, %v522, 0
        %549 = vmatprep.subr.bf16.mxu0 0
        %550 = vmatpush1.bf16.msra.mxu0 0
        %551 = vmatprep.subr.bf16.mxu0 0
        %552 = vmatpush1.bf16.msra.mxu0 0
        %553 = vmatprep.subr.bf16.mxu0 0
        %554 = vmatpush1.bf16.msra.mxu0 0
        %555 = vmatprep.subr.bf16.mxu0 0
        %556 = vmatpush1.bf16.msra.mxu0 0
        %557 = vmatprep.subr.bf16.mxu0 0
        %558 = vmatpush1.bf16.msra.mxu0 0
        %559 = vmatprep.subr.bf16.mxu0 0
        %560 = vmatpush1.bf16.msra.mxu0 0
        %561 = vmatprep.subr.bf16.mxu0 0
        %562 = vmatpush1.bf16.msra.mxu0 %v543
        %563 = vmatprep.subr.bf16.mxu0 0
        %564 = vmatpush1.bf16.msra.mxu0 %v542
        %565 = vmatprep.subr.bf16.mxu0 0
        %566 = vmatpush2.bf16.msra.mxu0 0
        %567 = vmatprep.subr.bf16.mxu0 0
        %568 = vmatpush2.bf16.msra.mxu0 0
        %569 = vmatprep.subr.bf16.mxu0 0
        %570 = vmatpush2.bf16.msra.mxu0 0
        %571 = vmatprep.subr.bf16.mxu0 0
        %572 = vmatpush2.bf16.msra.mxu0 0
        %573 = vmatprep.subr.bf16.mxu0 0
        %574 = vmatpush2.bf16.msra.mxu0 0
        %575 = vmatprep.subr.bf16.mxu0 0
        %576 = vmatpush2.bf16.msra.mxu0 0
        %577 = vmatprep.subr.bf16.mxu0 0
        %578 = vmatpush2.bf16.msra.mxu0 0
        %579 = vmatprep.subr.bf16.mxu0 0
        %580 = vmatpush2.bf16.msra.mxu0 0
        %581 = vmatprep.mubr.bf16.mxu0 0
        %582 = vmatmul.mubr.bf16.gmra.mxu0 %v547
        %v583 = vpop.f32.mrf.mxu0
        %v584 = vadd.f32 %v532, %v583
        %v585 = vpop.f32.mrf.mxu0
        %v586 = vpop.f32.mrf.mxu0
        %v587 = vpop.f32.mrf.mxu0
        %588 = vdwg.mxu0
        %v589 = vpack.c.bf16 %v584, %v584
        %591 = vrot.lane.b32.xlu0 %v589, 120
        %v592 = vpop.permute.xlu0 %591
        %593 = vrot.lane.b32.xlu0 %v589, 112
        %v594 = vpop.permute.xlu0 %593
        %595 = vrot.lane.b32.xlu0 %v589, 104
        %v596 = vpop.permute.xlu0 %595
        %597 = vrot.lane.b32.xlu0 %v589, 96
        %v598 = vpop.permute.xlu0 %597
        %vm599 = vcmask 64512
        %v601 = vsel %vm599, %v589, 0
        %v604 = vsel %vm599, %v598, 0
        %606 = vmatprep.subr.bf16.mxu0 0
        %607 = vmatpush1.bf16.xpose.msra.mxu0 0
        %608 = vmatprep.subr.bf16.mxu0 0
        %609 = vmatpush1.bf16.xpose.msra.mxu0 0
        %610 = vmatprep.subr.bf16.mxu0 0
        %611 = vmatpush1.bf16.xpose.msra.mxu0 0
        %612 = vmatprep.subr.bf16.mxu0 0
        %613 = vmatpush1.bf16.xpose.msra.mxu0 0
        %614 = vmatprep.subr.bf16.mxu0 0
        %615 = vmatpush1.bf16.xpose.msra.mxu0 0
        %616 = vmatprep.subr.bf16.mxu0 0
        %617 = vmatpush1.bf16.xpose.msra.mxu0 0
        %618 = vmatprep.subr.bf16.mxu0 0
        %619 = vmatpush1.bf16.xpose.msra.mxu0 0
        %620 = vmatprep.subr.bf16.mxu0 0
        %621 = vmatpush1.bf16.xpose.msra.mxu0 %v604
        %622 = vmatprep.subr.bf16.mxu0 0
        %623 = vmatpush2.bf16.xpose.msra.mxu0 0
        %624 = vmatprep.subr.bf16.mxu0 0
        %625 = vmatpush2.bf16.xpose.msra.mxu0 0
        %626 = vmatprep.subr.bf16.mxu0 0
        %627 = vmatpush2.bf16.xpose.msra.mxu0 0
        %628 = vmatprep.subr.bf16.mxu0 0
        %629 = vmatpush2.bf16.xpose.msra.mxu0 0
        %630 = vmatprep.subr.bf16.mxu0 0
        %631 = vmatpush2.bf16.xpose.msra.mxu0 0
        %632 = vmatprep.subr.bf16.mxu0 0
        %633 = vmatpush2.bf16.xpose.msra.mxu0 0
        %634 = vmatprep.subr.bf16.mxu0 0
        %635 = vmatpush2.bf16.xpose.msra.mxu0 0
        %636 = vmatprep.subr.bf16.mxu0 0
        %637 = vmatpush2.bf16.xpose.msra.mxu0 0
        %638 = vmatprep.mubr.bf16.mxu0 0
        %639 = vmatmul.mubr.bf16.gmra.mxu0 %v601
        %v640 = vpop.f32.mrf.mxu0
        %v641 = vadd.f32 0.0, %v640
        %v642 = vpop.f32.mrf.mxu0
        %v643 = vpop.f32.mrf.mxu0
        %v644 = vpop.f32.mrf.mxu0
        %645 = vdwg.mxu0
        %646 = vrot.lane.b32.xlu0 %v592, 96
        %v647 = vpop.permute.xlu0 %646
        %v649 = vsel %vm599, %v592, 0
        %v652 = vsel %vm599, %v647, 0
        %654 = vmatprep.subr.bf16.mxu0 0
        %655 = vmatpush1.bf16.xpose.msra.mxu0 0
        %656 = vmatprep.subr.bf16.mxu0 0
        %657 = vmatpush1.bf16.xpose.msra.mxu0 0
        %658 = vmatprep.subr.bf16.mxu0 0
        %659 = vmatpush1.bf16.xpose.msra.mxu0 0
        %660 = vmatprep.subr.bf16.mxu0 0
        %661 = vmatpush1.bf16.xpose.msra.mxu0 0
        %662 = vmatprep.subr.bf16.mxu0 0
        %663 = vmatpush1.bf16.xpose.msra.mxu0 0
        %664 = vmatprep.subr.bf16.mxu0 0
        %665 = vmatpush1.bf16.xpose.msra.mxu0 0
        %666 = vmatprep.subr.bf16.mxu0 0
        %667 = vmatpush1.bf16.xpose.msra.mxu0 0
        %668 = vmatprep.subr.bf16.mxu0 0
        %669 = vmatpush1.bf16.xpose.msra.mxu0 %v652
        %670 = vmatprep.subr.bf16.mxu0 0
        %671 = vmatpush2.bf16.xpose.msra.mxu0 0
        %672 = vmatprep.subr.bf16.mxu0 0
        %673 = vmatpush2.bf16.xpose.msra.mxu0 0
        %674 = vmatprep.subr.bf16.mxu0 0
        %675 = vmatpush2.bf16.xpose.msra.mxu0 0
        %676 = vmatprep.subr.bf16.mxu0 0
        %677 = vmatpush2.bf16.xpose.msra.mxu0 0
        %678 = vmatprep.subr.bf16.mxu0 0
        %679 = vmatpush2.bf16.xpose.msra.mxu0 0
        %680 = vmatprep.subr.bf16.mxu0 0
        %681 = vmatpush2.bf16.xpose.msra.mxu0 0
        %682 = vmatprep.subr.bf16.mxu0 0
        %683 = vmatpush2.bf16.xpose.msra.mxu0 0
        %684 = vmatprep.subr.bf16.mxu0 0
        %685 = vmatpush2.bf16.xpose.msra.mxu0 0
        %686 = vmatprep.mubr.bf16.mxu0 0
        %687 = vmatmul.mubr.bf16.gmra.mxu0 %v649
        %v688 = vpop.f32.mrf.mxu0
        %v689 = vadd.f32 0.0, %v688
        %v690 = vpop.f32.mrf.mxu0
        %v691 = vpop.f32.mrf.mxu0
        %v692 = vpop.f32.mrf.mxu0
        %693 = vdwg.mxu0
        %694 = vrot.lane.b32.xlu0 %v594, 96
        %v695 = vpop.permute.xlu0 %694
        %v697 = vsel %vm599, %v594, 0
        %v700 = vsel %vm599, %v695, 0
        %702 = vmatprep.subr.bf16.mxu0 0
        %703 = vmatpush1.bf16.xpose.msra.mxu0 0
        %704 = vmatprep.subr.bf16.mxu0 0
        %705 = vmatpush1.bf16.xpose.msra.mxu0 0
        %706 = vmatprep.subr.bf16.mxu0 0
        %707 = vmatpush1.bf16.xpose.msra.mxu0 0
        %708 = vmatprep.subr.bf16.mxu0 0
        %709 = vmatpush1.bf16.xpose.msra.mxu0 0
        %710 = vmatprep.subr.bf16.mxu0 0
        %711 = vmatpush1.bf16.xpose.msra.mxu0 0
        %712 = vmatprep.subr.bf16.mxu0 0
        %713 = vmatpush1.bf16.xpose.msra.mxu0 0
        %714 = vmatprep.subr.bf16.mxu0 0
        %715 = vmatpush1.bf16.xpose.msra.mxu0 0
        %716 = vmatprep.subr.bf16.mxu0 0
        %717 = vmatpush1.bf16.xpose.msra.mxu0 %v700
        %718 = vmatprep.subr.bf16.mxu0 0
        %719 = vmatpush2.bf16.xpose.msra.mxu0 0
        %720 = vmatprep.subr.bf16.mxu0 0
        %721 = vmatpush2.bf16.xpose.msra.mxu0 0
        %722 = vmatprep.subr.bf16.mxu0 0
        %723 = vmatpush2.bf16.xpose.msra.mxu0 0
        %724 = vmatprep.subr.bf16.mxu0 0
        %725 = vmatpush2.bf16.xpose.msra.mxu0 0
        %726 = vmatprep.subr.bf16.mxu0 0
        %727 = vmatpush2.bf16.xpose.msra.mxu0 0
        %728 = vmatprep.subr.bf16.mxu0 0
        %729 = vmatpush2.bf16.xpose.msra.mxu0 0
        %730 = vmatprep.subr.bf16.mxu0 0
        %731 = vmatpush2.bf16.xpose.msra.mxu0 0
        %732 = vmatprep.subr.bf16.mxu0 0
        %733 = vmatpush2.bf16.xpose.msra.mxu0 0
        %734 = vmatprep.mubr.bf16.mxu0 0
        %735 = vmatmul.mubr.bf16.gmra.mxu0 %v697
        %v736 = vpop.f32.mrf.mxu0
        %v737 = vadd.f32 0.0, %v736
        %v738 = vpop.f32.mrf.mxu0
        %v739 = vpop.f32.mrf.mxu0
        %v740 = vpop.f32.mrf.mxu0
        %741 = vdwg.mxu0
        %742 = vrot.lane.b32.xlu0 %v596, 96
        %v743 = vpop.permute.xlu0 %742
        %v745 = vsel %vm599, %v596, 0
        %v748 = vsel %vm599, %v743, 0
        %750 = vmatprep.subr.bf16.mxu0 0
        %751 = vmatpush1.bf16.xpose.msra.mxu0 0
        %752 = vmatprep.subr.bf16.mxu0 0
        %753 = vmatpush1.bf16.xpose.msra.mxu0 0
        %754 = vmatprep.subr.bf16.mxu0 0
        %755 = vmatpush1.bf16.xpose.msra.mxu0 0
        %756 = vmatprep.subr.bf16.mxu0 0
        %757 = vmatpush1.bf16.xpose.msra.mxu0 0
        %758 = vmatprep.subr.bf16.mxu0 0
        %759 = vmatpush1.bf16.xpose.msra.mxu0 0
        %760 = vmatprep.subr.bf16.mxu0 0
        %761 = vmatpush1.bf16.xpose.msra.mxu0 0
        %762 = vmatprep.subr.bf16.mxu0 0
        %763 = vmatpush1.bf16.xpose.msra.mxu0 0
        %764 = vmatprep.subr.bf16.mxu0 0
        %765 = vmatpush1.bf16.xpose.msra.mxu0 %v748
        %766 = vmatprep.subr.bf16.mxu0 0
        %767 = vmatpush2.bf16.xpose.msra.mxu0 0
        %768 = vmatprep.subr.bf16.mxu0 0
        %769 = vmatpush2.bf16.xpose.msra.mxu0 0
        %770 = vmatprep.subr.bf16.mxu0 0
        %771 = vmatpush2.bf16.xpose.msra.mxu0 0
        %772 = vmatprep.subr.bf16.mxu0 0
        %773 = vmatpush2.bf16.xpose.msra.mxu0 0
        %774 = vmatprep.subr.bf16.mxu0 0
        %775 = vmatpush2.bf16.xpose.msra.mxu0 0
        %776 = vmatprep.subr.bf16.mxu0 0
        %777 = vmatpush2.bf16.xpose.msra.mxu0 0
        %778 = vmatprep.subr.bf16.mxu0 0
        %779 = vmatpush2.bf16.xpose.msra.mxu0 0
        %780 = vmatprep.subr.bf16.mxu0 0
        %781 = vmatpush2.bf16.xpose.msra.mxu0 0
        %782 = vmatprep.mubr.bf16.mxu0 0
        %783 = vmatmul.mubr.bf16.gmra.mxu0 %v745
        %v784 = vpop.f32.mrf.mxu0
        %v785 = vadd.f32 0.0, %v784
        %v786 = vpop.f32.mrf.mxu0
        %v787 = vpop.f32.mrf.mxu0
        %v788 = vpop.f32.mrf.mxu0
        %789 = vdwg.mxu0
        %v790 = vmul.f32 %v641, 0.35355338
        %v791 = vmul.f32 %v689, 0.35355338
        %v792 = vmul.f32 %v737, 0.35355338
        %v793 = vmul.f32 %v785, 0.35355338
        %v794 = vsel %vm599, %v790, -inf
        %795 = vmax.xlane.f32.xlu0 %v794
        %v796 = vpop.xlane.xlu0 %795
        %v797 = vsel %vm599, %v791, -inf
        %798 = vmax.xlane.f32.xlu0 %v797
        %v799 = vpop.xlane.xlu0 %798
        %v800 = vsel %vm599, %v792, -inf
        %801 = vmax.xlane.f32.xlu0 %v800
        %v802 = vpop.xlane.xlu0 %801
        %v803 = vsel %vm599, %v793, -inf
        %804 = vmax.xlane.f32.xlu0 %v803
        %v805 = vpop.xlane.xlu0 %804
        %v806 = vsub.f32 %v790, %v796
        %v807 = vsub.f32 %v791, %v799
        %v808 = vsub.f32 %v792, %v802
        %v809 = vsub.f32 %v793, %v805
        %v810 = vmul.f32 %v806, 1.442695
        %v811 = vpow.pop %v810
        %v812 = vmul.f32 %v807, 1.442695
        %v813 = vpow.pop %v812
        %v814 = vmul.f32 %v808, 1.442695
        %v815 = vpow.pop %v814
        %v816 = vmul.f32 %v809, 1.442695
        %v817 = vpow.pop %v816
        %v818 = vsel %vm599, %v811, 0.0
        %819 = vadd.xlane.f32.xlu0 %v818
        %v820 = vpop.xlane.xlu0 %819
        %v821 = vsel %vm599, %v813, 0.0
        %822 = vadd.xlane.f32.xlu0 %v821
        %v823 = vpop.xlane.xlu0 %822
        %v824 = vsel %vm599, %v815, 0.0
        %825 = vadd.xlane.f32.xlu0 %v824
        %v826 = vpop.xlane.xlu0 %825
        %v827 = vsel %vm599, %v817, 0.0
        %828 = vadd.xlane.f32.xlu0 %v827
        %v829 = vpop.xlane.xlu0 %828
        %v830 = vrcp.pop %v820
        %v831 = vrcp.pop %v823
        %v832 = vrcp.pop %v826
        %v833 = vrcp.pop %v829
        %v834 = vmul.f32 %v811, %v830
        %v835 = vmul.f32 %v813, %v831
        %v836 = vmul.f32 %v815, %v832
        %v837 = vmul.f32 %v817, %v833
        %v838 = vpack.c.bf16 %v834, %v834
        %v839 = vpack.c.bf16 %v835, %v835
        %v840 = vpack.c.bf16 %v836, %v836
        %v841 = vpack.c.bf16 %v837, %v837
        %842 = vrot.lane.b32.xlu0 %v589, 64
        %v843 = vpop.permute.xlu0 %842
        %v845 = vsel %vm599, %v838, 0
        %vm847 = vcmask 1043456
        %v849 = vsel %vm847, %v843, 0
        %851 = vmatprep.subr.bf16.mxu0 0
        %852 = vmatpush1.bf16.msra.mxu0 0
        %853 = vmatprep.subr.bf16.mxu0 0
        %854 = vmatpush1.bf16.msra.mxu0 0
        %855 = vmatprep.subr.bf16.mxu0 0
        %856 = vmatpush1.bf16.msra.mxu0 0
        %857 = vmatprep.subr.bf16.mxu0 0
        %858 = vmatpush1.bf16.msra.mxu0 0
        %859 = vmatprep.subr.bf16.mxu0 0
        %860 = vmatpush1.bf16.msra.mxu0 0
        %861 = vmatprep.subr.bf16.mxu0 0
        %862 = vmatpush1.bf16.msra.mxu0 0
        %863 = vmatprep.subr.bf16.mxu0 0
        %864 = vmatpush1.bf16.msra.mxu0 0
        %865 = vmatprep.subr.bf16.mxu0 0
        %866 = vmatpush1.bf16.msra.mxu0 %v849
        %867 = vmatprep.subr.bf16.mxu0 0
        %868 = vmatpush2.bf16.msra.mxu0 0
        %869 = vmatprep.subr.bf16.mxu0 0
        %870 = vmatpush2.bf16.msra.mxu0 0
        %871 = vmatprep.subr.bf16.mxu0 0
        %872 = vmatpush2.bf16.msra.mxu0 0
        %873 = vmatprep.subr.bf16.mxu0 0
        %874 = vmatpush2.bf16.msra.mxu0 0
        %875 = vmatprep.subr.bf16.mxu0 0
        %876 = vmatpush2.bf16.msra.mxu0 0
        %877 = vmatprep.subr.bf16.mxu0 0
        %878 = vmatpush2.bf16.msra.mxu0 0
        %879 = vmatprep.subr.bf16.mxu0 0
        %880 = vmatpush2.bf16.msra.mxu0 0
        %881 = vmatprep.subr.bf16.mxu0 0
        %882 = vmatpush2.bf16.msra.mxu0 0
        %883 = vmatprep.mubr.bf16.mxu0 0
        %884 = vmatmul.mubr.bf16.gmra.mxu0 %v845
        %v885 = vpop.f32.mrf.mxu0
        %v886 = vadd.f32 0.0, %v885
        %v887 = vpop.f32.mrf.mxu0
        %v888 = vpop.f32.mrf.mxu0
        %v889 = vpop.f32.mrf.mxu0
        %890 = vdwg.mxu0
        %891 = vrot.lane.b32.xlu0 %v592, 64
        %v892 = vpop.permute.xlu0 %891
        %v894 = vsel %vm599, %v839, 0
        %v897 = vsel %vm847, %v892, 0
        %899 = vmatprep.subr.bf16.mxu0 0
        %900 = vmatpush1.bf16.msra.mxu0 0
        %901 = vmatprep.subr.bf16.mxu0 0
        %902 = vmatpush1.bf16.msra.mxu0 0
        %903 = vmatprep.subr.bf16.mxu0 0
        %904 = vmatpush1.bf16.msra.mxu0 0
        %905 = vmatprep.subr.bf16.mxu0 0
        %906 = vmatpush1.bf16.msra.mxu0 0
        %907 = vmatprep.subr.bf16.mxu0 0
        %908 = vmatpush1.bf16.msra.mxu0 0
        %909 = vmatprep.subr.bf16.mxu0 0
        %910 = vmatpush1.bf16.msra.mxu0 0
        %911 = vmatprep.subr.bf16.mxu0 0
        %912 = vmatpush1.bf16.msra.mxu0 0
        %913 = vmatprep.subr.bf16.mxu0 0
        %914 = vmatpush1.bf16.msra.mxu0 %v897
        %915 = vmatprep.subr.bf16.mxu0 0
        %916 = vmatpush2.bf16.msra.mxu0 0
        %917 = vmatprep.subr.bf16.mxu0 0
        %918 = vmatpush2.bf16.msra.mxu0 0
        %919 = vmatprep.subr.bf16.mxu0 0
        %920 = vmatpush2.bf16.msra.mxu0 0
        %921 = vmatprep.subr.bf16.mxu0 0
        %922 = vmatpush2.bf16.msra.mxu0 0
        %923 = vmatprep.subr.bf16.mxu0 0
        %924 = vmatpush2.bf16.msra.mxu0 0
        %925 = vmatprep.subr.bf16.mxu0 0
        %926 = vmatpush2.bf16.msra.mxu0 0
        %927 = vmatprep.subr.bf16.mxu0 0
        %928 = vmatpush2.bf16.msra.mxu0 0
        %929 = vmatprep.subr.bf16.mxu0 0
        %930 = vmatpush2.bf16.msra.mxu0 0
        %931 = vmatprep.mubr.bf16.mxu0 0
        %932 = vmatmul.mubr.bf16.gmra.mxu0 %v894
        %v933 = vpop.f32.mrf.mxu0
        %v934 = vadd.f32 0.0, %v933
        %v935 = vpop.f32.mrf.mxu0
        %v936 = vpop.f32.mrf.mxu0
        %v937 = vpop.f32.mrf.mxu0
        %938 = vdwg.mxu0
        %939 = vrot.lane.b32.xlu0 %v594, 64
        %v940 = vpop.permute.xlu0 %939
        %v942 = vsel %vm599, %v840, 0
        %v945 = vsel %vm847, %v940, 0
        %947 = vmatprep.subr.bf16.mxu0 0
        %948 = vmatpush1.bf16.msra.mxu0 0
        %949 = vmatprep.subr.bf16.mxu0 0
        %950 = vmatpush1.bf16.msra.mxu0 0
        %951 = vmatprep.subr.bf16.mxu0 0
        %952 = vmatpush1.bf16.msra.mxu0 0
        %953 = vmatprep.subr.bf16.mxu0 0
        %954 = vmatpush1.bf16.msra.mxu0 0
        %955 = vmatprep.subr.bf16.mxu0 0
        %956 = vmatpush1.bf16.msra.mxu0 0
        %957 = vmatprep.subr.bf16.mxu0 0
        %958 = vmatpush1.bf16.msra.mxu0 0
        %959 = vmatprep.subr.bf16.mxu0 0
        %960 = vmatpush1.bf16.msra.mxu0 0
        %961 = vmatprep.subr.bf16.mxu0 0
        %962 = vmatpush1.bf16.msra.mxu0 %v945
        %963 = vmatprep.subr.bf16.mxu0 0
        %964 = vmatpush2.bf16.msra.mxu0 0
        %965 = vmatprep.subr.bf16.mxu0 0
        %966 = vmatpush2.bf16.msra.mxu0 0
        %967 = vmatprep.subr.bf16.mxu0 0
        %968 = vmatpush2.bf16.msra.mxu0 0
        %969 = vmatprep.subr.bf16.mxu0 0
        %970 = vmatpush2.bf16.msra.mxu0 0
        %971 = vmatprep.subr.bf16.mxu0 0
        %972 = vmatpush2.bf16.msra.mxu0 0
        %973 = vmatprep.subr.bf16.mxu0 0
        %974 = vmatpush2.bf16.msra.mxu0 0
        %975 = vmatprep.subr.bf16.mxu0 0
        %976 = vmatpush2.bf16.msra.mxu0 0
        %977 = vmatprep.subr.bf16.mxu0 0
        %978 = vmatpush2.bf16.msra.mxu0 0
        %979 = vmatprep.mubr.bf16.mxu0 0
        %980 = vmatmul.mubr.bf16.gmra.mxu0 %v942
        %v981 = vpop.f32.mrf.mxu0
        %v982 = vadd.f32 0.0, %v981
        %v983 = vpop.f32.mrf.mxu0
        %v984 = vpop.f32.mrf.mxu0
        %v985 = vpop.f32.mrf.mxu0
        %986 = vdwg.mxu0
        %987 = vrot.lane.b32.xlu0 %v596, 64
        %v988 = vpop.permute.xlu0 %987
        %v990 = vsel %vm599, %v841, 0
        %v993 = vsel %vm847, %v988, 0
        %995 = vmatprep.subr.bf16.mxu0 0
        %996 = vmatpush1.bf16.msra.mxu0 0
        %997 = vmatprep.subr.bf16.mxu0 0
        %998 = vmatpush1.bf16.msra.mxu0 0
        %999 = vmatprep.subr.bf16.mxu0 0
        %1000 = vmatpush1.bf16.msra.mxu0 0
        %1001 = vmatprep.subr.bf16.mxu0 0
        %1002 = vmatpush1.bf16.msra.mxu0 0
        %1003 = vmatprep.subr.bf16.mxu0 0
        %1004 = vmatpush1.bf16.msra.mxu0 0
        %1005 = vmatprep.subr.bf16.mxu0 0
        %1006 = vmatpush1.bf16.msra.mxu0 0
        %1007 = vmatprep.subr.bf16.mxu0 0
        %1008 = vmatpush1.bf16.msra.mxu0 0
        %1009 = vmatprep.subr.bf16.mxu0 0
        %1010 = vmatpush1.bf16.msra.mxu0 %v993
        %1011 = vmatprep.subr.bf16.mxu0 0
        %1012 = vmatpush2.bf16.msra.mxu0 0
        %1013 = vmatprep.subr.bf16.mxu0 0
        %1014 = vmatpush2.bf16.msra.mxu0 0
        %1015 = vmatprep.subr.bf16.mxu0 0
        %1016 = vmatpush2.bf16.msra.mxu0 0
        %1017 = vmatprep.subr.bf16.mxu0 0
        %1018 = vmatpush2.bf16.msra.mxu0 0
        %1019 = vmatprep.subr.bf16.mxu0 0
        %1020 = vmatpush2.bf16.msra.mxu0 0
        %1021 = vmatprep.subr.bf16.mxu0 0
        %1022 = vmatpush2.bf16.msra.mxu0 0
        %1023 = vmatprep.subr.bf16.mxu0 0
        %1024 = vmatpush2.bf16.msra.mxu0 0
        %1025 = vmatprep.subr.bf16.mxu0 0
        %1026 = vmatpush2.bf16.msra.mxu0 0
        %1027 = vmatprep.mubr.bf16.mxu0 0
        %1028 = vmatmul.mubr.bf16.gmra.mxu0 %v990
        %v1029 = vpop.f32.mrf.mxu0
        %v1030 = vadd.f32 0.0, %v1029
        %v1031 = vpop.f32.mrf.mxu0
        %v1032 = vpop.f32.mrf.mxu0
        %v1033 = vpop.f32.mrf.mxu0
        %1034 = vdwg.mxu0
        %v1035 = vpack.c.bf16 %v886, %v886
        %v1036 = vpack.c.bf16 %v934, %v934
        %v1037 = vpack.c.bf16 %v982, %v982
        %v1038 = vpack.c.bf16 %v1030, %v1030
        %1040 = vrot.lane.b32.xlu0 %v1036, 8
        %v1041 = vpop.permute.xlu0 %1040
        %1043 = vrot.lane.b32.xlu0 %v1037, 16
        %v1044 = vpop.permute.xlu0 %1043
        %1046 = vrot.lane.b32.xlu0 %v1038, 24
        %v1047 = vpop.permute.xlu0 %1046
        %v1050 = vsel %vm599, %v1035, %v1041
        %vm1051 = vcmask 130048
        %v1053 = vsel %vm1051, %v1050, %v1044
        %vm1054 = vcmask 195584
        %v1056 = vsel %vm1054, %v1053, %v1047
        %v1057 = vld [vmem:[%s5] sm:$0xf]
        %v1058 = vld [vmem:[%s5 + $0x4] sm:$0xf]
        %v1059 = vld [vmem:[%s5 + $0x8] sm:$0xf]
        %v1060 = vld [vmem:[%s5 + $0xc] sm:$0xf]
        %v1061 = vld [vmem:[%s6] sm:$0x1]
        %v1063 = vlaneseq
        %v1064 = vshrl.u32 %v1063, 7
        %v1065 = vsub.s32 0, %v1064
        %v1066 = vrot.slane %v1061, %v1065
        %v1072 = vunpack.c.l.b16 %v1057
        %v1073 = vunpack.c.l.b16 %v1058
        %v1074 = vunpack.c.l.b16 %v1059
        %v1075 = vunpack.c.l.b16 %v1060
        %v1076 = vpack.c.b16 %v1073, %v1072
        %v1077 = vpack.c.b16 %v1075, %v1074
        %v1080 = vsel %vm493, %v1056, 0
        %1082 = vmatprep.subr.bf16.mxu0 0
        %1083 = vmatpush1.bf16.msra.mxu0 0
        %1084 = vmatprep.subr.bf16.mxu0 0
        %1085 = vmatpush1.bf16.msra.mxu0 0
        %1086 = vmatprep.subr.bf16.mxu0 0
        %1087 = vmatpush1.bf16.msra.mxu0 0
        %1088 = vmatprep.subr.bf16.mxu0 0
        %1089 = vmatpush1.bf16.msra.mxu0 0
        %1090 = vmatprep.subr.bf16.mxu0 0
        %1091 = vmatpush1.bf16.msra.mxu0 0
        %1092 = vmatprep.subr.bf16.mxu0 0
        %1093 = vmatpush1.bf16.msra.mxu0 0
        %1094 = vmatprep.subr.bf16.mxu0 0
        %1095 = vmatpush1.bf16.msra.mxu0 %v1077
        %1096 = vmatprep.subr.bf16.mxu0 0
        %1097 = vmatpush1.bf16.msra.mxu0 %v1076
        %1098 = vmatprep.subr.bf16.mxu0 0
        %1099 = vmatpush2.bf16.msra.mxu0 0
        %1100 = vmatprep.subr.bf16.mxu0 0
        %1101 = vmatpush2.bf16.msra.mxu0 0
        %1102 = vmatprep.subr.bf16.mxu0 0
        %1103 = vmatpush2.bf16.msra.mxu0 0
        %1104 = vmatprep.subr.bf16.mxu0 0
        %1105 = vmatpush2.bf16.msra.mxu0 0
        %1106 = vmatprep.subr.bf16.mxu0 0
        %1107 = vmatpush2.bf16.msra.mxu0 0
        %1108 = vmatprep.subr.bf16.mxu0 0
        %1109 = vmatpush2.bf16.msra.mxu0 0
        %1110 = vmatprep.subr.bf16.mxu0 0
        %1111 = vmatpush2.bf16.msra.mxu0 0
        %1112 = vmatprep.subr.bf16.mxu0 0
        %1113 = vmatpush2.bf16.msra.mxu0 0
        %1114 = vmatprep.mubr.bf16.mxu0 0
        %1115 = vmatmul.mubr.bf16.gmra.mxu0 %v1080
        %v1116 = vpop.f32.mrf.mxu0
        %v1117 = vadd.f32 %v1066, %v1116
        %v1118 = vpop.f32.mrf.mxu0
        %v1119 = vpop.f32.mrf.mxu0
        %v1120 = vpop.f32.mrf.mxu0
        %1121 = vdwg.mxu0
        %v1122 = vadd.f32 %v490, %v1117
        %v1123 = vld [vmem:[#allocation2] sm:$0x1]
        %v1124 = vld [vmem:[#allocation5] sm:$0x1]
        %v1125 = vsel %vm493, %v1122, 0.0
        %1126 = vadd.xlane.f32.xlu0 %v1125
        %v1127 = vpop.xlane.xlu0 %1126
        %v1128 = vmul.f32 %v1127, %v497
        %v1129 = vsub.f32 %v1122, %v1128
        %v1130 = vmul.f32 %v1129, %v1129
        %v1131 = vsel %vm493, %v1130, 0.0
        %1132 = vadd.xlane.f32.xlu0 %v1131
        %v1133 = vpop.xlane.xlu0 %1132
        %v1134 = vmul.f32 %v1133, %v497
        %v1135 = vadd.f32 %v1134, 1e-05
        %v1136 = vrsqrt.pop %v1135
        %v1137 = vmul.f32 %v1129, %v1136
        %v1139 = vlaneseq
        %v1140 = vshrl.u32 %v1139, 7
        %v1141 = vsub.s32 0, %v1140
        %v1142 = vrot.slane %v1123, %v1141
        %v1144 = vmul.f32 %v1137, %v1142
        %v1146 = vlaneseq
        %v1147 = vshrl.u32 %v1146, 7
        %v1148 = vsub.s32 0, %v1147
        %v1149 = vrot.slane %v1124, %v1148
        %v1151 = vadd.f32 %v1144, %v1149
        %v1152 = vpack.c.bf16 %v1151, %v1151
        %v1153 = vld [vmem:[#allocation7] sm:$0xf]
        %v1154 = vld [vmem:[#allocation7 + $0x4] sm:$0xf]
        %v1155 = vld [vmem:[#allocation7 + $0x8] sm:$0xf]
        %v1156 = vld [vmem:[#allocation7 + $0xc] sm:$0xf]
        %v1157 = vld [vmem:[#allocation8] sm:$0x1]
        %v1159 = vlaneseq
        %v1160 = vshrl.u32 %v1159, 7
        %v1161 = vsub.s32 0, %v1160
        %v1162 = vrot.slane %v1157, %v1161
        %v1168 = vunpack.c.l.b16 %v1153
        %v1169 = vunpack.c.l.b16 %v1154
        %v1170 = vunpack.c.l.b16 %v1155
        %v1171 = vunpack.c.l.b16 %v1156
        %v1172 = vpack.c.b16 %v1169, %v1168
        %v1173 = vpack.c.b16 %v1171, %v1170
        %v1177 = vsel %vm493, %v1152, 0
        %1179 = vmatprep.subr.bf16.mxu0 0
        %1180 = vmatpush1.bf16.msra.mxu0 0
        %1181 = vmatprep.subr.bf16.mxu0 0
        %1182 = vmatpush1.bf16.msra.mxu0 0
        %1183 = vmatprep.subr.bf16.mxu0 0
        %1184 = vmatpush1.bf16.msra.mxu0 0
        %1185 = vmatprep.subr.bf16.mxu0 0
        %1186 = vmatpush1.bf16.msra.mxu0 0
        %1187 = vmatprep.subr.bf16.mxu0 0
        %1188 = vmatpush1.bf16.msra.mxu0 0
        %1189 = vmatprep.subr.bf16.mxu0 0
        %1190 = vmatpush1.bf16.msra.mxu0 0
        %1191 = vmatprep.subr.bf16.mxu0 0
        %1192 = vmatpush1.bf16.msra.mxu0 %v1173
        %1193 = vmatprep.subr.bf16.mxu0 0
        %1194 = vmatpush1.bf16.msra.mxu0 %v1172
        %1195 = vmatprep.subr.bf16.mxu0 0
        %1196 = vmatpush2.bf16.msra.mxu0 0
        %1197 = vmatprep.subr.bf16.mxu0 0
        %1198 = vmatpush2.bf16.msra.mxu0 0
        %1199 = vmatprep.subr.bf16.mxu0 0
        %1200 = vmatpush2.bf16.msra.mxu0 0
        %1201 = vmatprep.subr.bf16.mxu0 0
        %1202 = vmatpush2.bf16.msra.mxu0 0
        %1203 = vmatprep.subr.bf16.mxu0 0
        %1204 = vmatpush2.bf16.msra.mxu0 0
        %1205 = vmatprep.subr.bf16.mxu0 0
        %1206 = vmatpush2.bf16.msra.mxu0 0
        %1207 = vmatprep.subr.bf16.mxu0 0
        %1208 = vmatpush2.bf16.msra.mxu0 0
        %1209 = vmatprep.subr.bf16.mxu0 0
        %1210 = vmatpush2.bf16.msra.mxu0 0
        %1211 = vmatprep.mubr.bf16.mxu0 0
        %1212 = vmatmul.mubr.bf16.gmra.mxu0 %v1177
        %v1213 = vpop.f32.mrf.mxu0
        %v1214 = vadd.f32 %v1162, %v1213
        %v1215 = vpop.f32.mrf.mxu0
        %v1216 = vpop.f32.mrf.mxu0
        %v1217 = vpop.f32.mrf.mxu0
        %1218 = vdwg.mxu0
        %v1219 = vpack.c.bf16 %v1214, %v1214
        %v1220 = vmax.bf16 %v1219, 0
        %v1221 = vld [vmem:[%s11] sm:$0xf]
        %v1222 = vld [vmem:[%s11 + $0x4] sm:$0xf]
        %v1223 = vld [vmem:[%s11 + $0x8] sm:$0xf]
        %v1224 = vld [vmem:[%s11 + $0xc] sm:$0xf]
        %v1225 = vld [vmem:[%s11 + $0x10] sm:$0xf]
        %v1226 = vld [vmem:[%s11 + $0x14] sm:$0xf]
        %v1227 = vld [vmem:[%s11 + $0x18] sm:$0xf]
        %v1228 = vld [vmem:[%s11 + $0x1c] sm:$0xf]
        %v1229 = vld [vmem:[%s12] sm:$0x1]
        %v1231 = vlaneseq
        %v1232 = vshrl.u32 %v1231, 7
        %v1233 = vsub.s32 0, %v1232
        %v1234 = vrot.slane %v1229, %v1233
        %v1244 = vunpack.c.l.b16 %v1221
        %v1245 = vunpack.c.l.b16 %v1222
        %v1246 = vunpack.c.l.b16 %v1223
        %v1247 = vunpack.c.l.b16 %v1224
        %v1248 = vunpack.c.l.b16 %v1225
        %v1249 = vunpack.c.l.b16 %v1226
        %v1250 = vunpack.c.l.b16 %v1227
        %v1251 = vunpack.c.l.b16 %v1228
        %v1252 = vpack.c.b16 %v1245, %v1244
        %v1253 = vpack.c.b16 %v1247, %v1246
        %v1254 = vpack.c.b16 %v1249, %v1248
        %v1255 = vpack.c.b16 %v1251, %v1250
        %vm1260 = vcmask 523264
        %v1262 = vsel %vm1260, %v1220, 0
        %1264 = vmatprep.subr.bf16.mxu0 0
        %1265 = vmatpush1.bf16.msra.mxu0 0
        %1266 = vmatprep.subr.bf16.mxu0 0
        %1267 = vmatpush1.bf16.msra.mxu0 0
        %1268 = vmatprep.subr.bf16.mxu0 0
        %1269 = vmatpush1.bf16.msra.mxu0 0
        %1270 = vmatprep.subr.bf16.mxu0 0
        %1271 = vmatpush1.bf16.msra.mxu0 0
        %1272 = vmatprep.subr.bf16.mxu0 0
        %1273 = vmatpush1.bf16.msra.mxu0 %v1255
        %1274 = vmatprep.subr.bf16.mxu0 0
        %1275 = vmatpush1.bf16.msra.mxu0 %v1254
        %1276 = vmatprep.subr.bf16.mxu0 0
        %1277 = vmatpush1.bf16.msra.mxu0 %v1253
        %1278 = vmatprep.subr.bf16.mxu0 0
        %1279 = vmatpush1.bf16.msra.mxu0 %v1252
        %1280 = vmatprep.subr.bf16.mxu0 0
        %1281 = vmatpush2.bf16.msra.mxu0 0
        %1282 = vmatprep.subr.bf16.mxu0 0
        %1283 = vmatpush2.bf16.msra.mxu0 0
        %1284 = vmatprep.subr.bf16.mxu0 0
        %1285 = vmatpush2.bf16.msra.mxu0 0
        %1286 = vmatprep.subr.bf16.mxu0 0
        %1287 = vmatpush2.bf16.msra.mxu0 0
        %1288 = vmatprep.subr.bf16.mxu0 0
        %1289 = vmatpush2.bf16.msra.mxu0 0
        %1290 = vmatprep.subr.bf16.mxu0 0
        %1291 = vmatpush2.bf16.msra.mxu0 0
        %1292 = vmatprep.subr.bf16.mxu0 0
        %1293 = vmatpush2.bf16.msra.mxu0 0
        %1294 = vmatprep.subr.bf16.mxu0 0
        %1295 = vmatpush2.bf16.msra.mxu0 0
        %1296 = vmatprep.mubr.bf16.mxu0 0
        %1297 = vmatmul.mubr.bf16.gmra.mxu0 %v1262
        %v1298 = vpop.f32.mrf.mxu0
        %v1299 = vadd.f32 %v1234, %v1298
        %v1300 = vpop.f32.mrf.mxu0
        %v1301 = vpop.f32.mrf.mxu0
        %v1302 = vpop.f32.mrf.mxu0
        %1303 = vdwg.mxu0
        %v1304 = vadd.f32 %v1122, %v1299
        %1305 = vst.msk [vmem:[%s484] sm:$0xff] %vm493, %v1304
        %s1306 = sand.u32 %s316, 1
        %s1307 = scalar_lea.sflag [#allocation4], %s1306
        %s1308 = sand.u32 %s316, 1
        %s1309 = smul.addr %s1308, 8
        %s1310 = scalar_lea.vmem [#allocation10], %s1309
        // Predicated region
        $region89: #{tpu_custom_call.1} parent=71 // pred_check
          %p1311 = pneg %p326
        $region90: #{tpu_custom_call.1} parent=71 // pred_check_branch
          %1313 = sbr.rel (%p1311) target = $region92
        $region91: #{tpu_custom_call.1} parent=71 // pred_region
          %s1315 = ssub.s32 128, 128
          %1316 = vsyncadd %s1307, %s1315
          %s1317 = smul.addr %s30, 128
          %s1318 = scalar_lea.hbm %s13, %s1317
          %s1320 = sshll.u32 %s1310, 4
          %s1321 = int_to_ptr.vmem [resolvable:$true] %s1320
          %1323 = dma.vmem_to_hbm [thread:$0]  %s1321, 128, %s1318, %s1307
        $region92: #{tpu_custom_call.1} parent=71 // pred_fallthru
          _
      $region72: #{tpu_custom_call.1} parent=5 // pred_fallthru
        _
      %p1324 = scmp.le.s32.totalorder 2, %s25
      // Predicated region
      $region93: #{tpu_custom_call.1} parent=5 // pred_check
        %p1325 = pneg %p1324
      $region94: #{tpu_custom_call.1} parent=5 // pred_check_branch
        %1327 = sbr.rel (%p1325) target = $region96
      $region95: #{tpu_custom_call.1} parent=5 // pred_region
        %s1328 = ssub.s32 %s25, 2
        // Predicated region
        $region97: #{tpu_custom_call.1} parent=95 // pred_check
          %p1329 = pneg %p332
        $region98: #{tpu_custom_call.1} parent=95 // pred_check_branch
          %1331 = sbr.rel (%p1329) target = $region100
        $region99: #{tpu_custom_call.1} parent=95 // pred_region
          %s1332 = sand.u32 %s317, 1
          %s1333 = scalar_lea.sflag [#allocation4], %s1332
          %s1334 = sand.u32 %s317, 1
          %s1335 = smul.addr %s1334, 8
          %s1336 = scalar_lea.vmem [#allocation10], %s1335
          %1337 = dma.done %s1333, 128
        $region100: #{tpu_custom_call.1} parent=95 // pred_fallthru
          _
      $region96: #{tpu_custom_call.1} parent=5 // pred_fallthru
        _
    $region6: #{tpu_custom_call.1} parent=1 // loop_footer
      %s29 = sadd.s32 1, %s25
    $region7: #{tpu_custom_call.1} parent=1 // loop_footer_branch
      %24 = sbr.rel target = $region3
    $region8: #{tpu_custom_call.1} parent=1 // loop_exit
      _
    %1338 = vsyncpa [#allocation3], 1
    %s1339 = scalar_lea.sflag [#allocation3], 1
    %1340 = vsyncpa %s1339, 1
    %1341 = vsyncpa [#allocation6], 1
    %1342 = vsyncpa [#allocation9], 1
    %1343 = vsyncpa [#allocation4], 1
    %s1344 = scalar_lea.sflag [#allocation4], 1
    %1345 = vsyncpa %s1344, 1

</llo_original>
